<compile_context>
chip_gen: v6e
topology: v6e:2x2x1
jax: 0.10.0
libtpu: 0.0.40
codegen_flags: <defaults>
</compile_context>

<pallas_src>
import jax
import jax.numpy as jnp
from jax.experimental import pallas as pl
from jax.experimental.pallas import tpu as pltpu

EPS = 1e-5


# ---------------------------------------------------------------------------
# Weight preprocessing (wrapper side, once per parameter set)
# ---------------------------------------------------------------------------
def _band_weights(w, W):
    """PyTorch (Cout, Cin, 3, 3) conv weight -> (3*W*Cin, W*Cout) banded
    block-Toeplitz matrix.  The W-direction zero padding is folded in and the
    3 kernel-row bands are stacked along the contraction axis so the whole
    3x3 conv becomes a single matmul against an (H, 3*W*Cin) im2row."""
    wk = jnp.transpose(w, (2, 3, 1, 0)).astype(jnp.float32)   # (kh, kw, Cin, Cout)
    Cin, Cout = wk.shape[2], wk.shape[3]
    dw = jnp.arange(3)[:, None, None]
    jin = jnp.arange(W)[None, :, None]
    jout = jnp.arange(W)[None, None, :]
    M = (jin == jout + dw - 1).astype(jnp.float32)            # (3, W, W)
    T = jnp.einsum('hkio,kab->haibo', wk, M)                  # (3, W, Cin, W, Cout)
    return T.reshape(3 * W * Cin, W * Cout)


def _blockdiag_1x1(ws_k, W):
    """(Cin, Cout) 1x1-conv weight -> (W*Cin, W*Cout) block-diagonal matrix."""
    eye = jnp.eye(W, dtype=jnp.float32)
    Cin, Cout = ws_k.shape
    return jnp.einsum('io,ab->aibo', ws_k.astype(jnp.float32),
                      eye).reshape(W * Cin, W * Cout)


# ---------------------------------------------------------------------------
# Kernels (one image per grid step; grid axis is "parallel")
# ---------------------------------------------------------------------------
def _im2row(x):
    """(H, C) -> (H, 3C): [row i-1 | row i | row i+1] with zero H-halo rows."""
    H, C = x.shape
    z = jnp.zeros((1, C), x.dtype)
    prev = jnp.concatenate([z, x[:H - 1]], axis=0)   # row i-1 (0 at i=0)
    nxt = jnp.concatenate([x[1:], z], axis=0)        # row i+1 (0 at i=H-1)
    return jnp.concatenate([prev, x, nxt], axis=1)


def _row_stats(acc):
    """(H, WC) f32 -> (2, WC): [sum over rows ; sum of squares over rows]."""
    return jnp.concatenate(
        [jnp.sum(acc, axis=0, keepdims=True),
         jnp.sum(acc * acc, axis=0, keepdims=True)], axis=0)


def _make_conv1_kernel(H, WCin, WCout):
    def kernel(x_ref, w_ref, y_ref, st_ref):
        x = x_ref[0]                                           # (H, W*Cin) f32
        im = _im2row(x).astype(jnp.bfloat16)                   # (H, 3*W*Cin)
        acc = jnp.dot(im, w_ref[...],                          # one fused MXU push
                      preferred_element_type=jnp.float32)      # (H, W*Cout) f32
        st_ref[0] = _row_stats(acc)                            # per-image partials
        y_ref[0] = acc.astype(y_ref.dtype)                     # pre-BN, bf16 round trip
    return kernel


def _make_conv2_kernel(H, WCout):
    def kernel(y1_ref, sc_ref, sh_ref, w_ref, y2_ref, st_ref):
        # BN1 affine (global batch stats, finalized outside) + ReLU, in f32.
        h = jnp.maximum(y1_ref[0].astype(jnp.float32) * sc_ref[...] + sh_ref[...],
                        0.0)                                   # (H, W*Cout)
        im = _im2row(h).astype(jnp.bfloat16)                   # (H, 3*W*Cout)
        acc = jnp.dot(im, w_ref[...],
                      preferred_element_type=jnp.float32)      # (H, W*Cout) f32
        st_ref[0] = _row_stats(acc)
        y2_ref[0] = acc                                        # pre-BN2, f32
    return kernel


def _make_out_kernel(H, WCin, WCout):
    def kernel(x_ref, y2_ref, ws_ref, bs_ref, sc_ref, sh_ref, out_ref):
        # 1x1-conv shortcut recomputed from x (cheaper than an HBM round trip).
        ident = jnp.dot(x_ref[0].astype(jnp.bfloat16), ws_ref[...],
                        preferred_element_type=jnp.float32) + bs_ref[...]
        # BN2 affine + residual add + ReLU, lane-dense unmasked store.
        out_ref[0] = jnp.maximum(
            y2_ref[0] * sc_ref[...] + sh_ref[...] + ident, 0.0)
    return kernel


# ---------------------------------------------------------------------------
# Wrapper
# ---------------------------------------------------------------------------
def residual_block(x_nchw, params):
    """x_nchw: (N, Cin, H, W) float32. Returns (N, Cout, H, W) float32."""
    (w1, b1, g1, be1, w2, b2, g2, be2, ws, bs) = params
    N, Cin, H, W = x_nchw.shape
    Cout = w1.shape[0]
    WCin, WCout = W * Cin, W * Cout
    inv_P = 1.0 / float(N * H * W)

    # Lane-dense activation layout (N, H, W*C).  NCHW in/out is kept only to
    # match the PyTorch module interface; no jnp.pad is needed anymore.
    x_rows = jnp.transpose(x_nchw, (0, 2, 3, 1)).reshape(
        N, H, WCin).astype(jnp.float32)

    # bf16 MXU operands (accumulation stays f32 inside the kernels).
    t1 = _band_weights(w1, W).astype(jnp.bfloat16)            # (3*W*Cin,  W*Cout)
    t2 = _band_weights(w2, W).astype(jnp.bfloat16)            # (3*W*Cout, W*Cout)
    if ws is None:  # identity shortcut (in_channels == out_channels)
        ws_k = jnp.eye(Cin, dtype=jnp.float32)
        bs = jnp.zeros((Cout,), jnp.float32)
    else:
        ws_k = jnp.transpose(ws[:, :, 0, 0], (1, 0))          # (Cin, Cout)
    ws_blk = _blockdiag_1x1(ws_k, W).astype(jnp.bfloat16)     # (W*Cin, W*Cout)

    lane = lambda v: jnp.tile(v.astype(jnp.float32), W).reshape(1, WCout)

    cparams = pltpu.CompilerParams(
        dimension_semantics=("parallel",),        # megacore axis on v7x
        vmem_limit_bytes=32 * 1024 * 1024)

    img_in = lambda c: pl.BlockSpec((1, H, c), lambda n: (n, 0, 0))
    stat_out = pl.BlockSpec((1, 2, WCout), lambda n: (n, 0, 0))
    const2d = lambda a, b: pl.BlockSpec((a, b), lambda n: (0, 0))  # resident weights

    def bn_affine(st, g, be):
        # Cross-image finalize of the per-image partial stats (tiny, in JAX).
        tot = st.sum(axis=0).reshape(2, W, Cout).sum(axis=1)       # (2, Cout)
        mean = tot[0] * inv_P
        var = tot[1] * inv_P - mean * mean
        scale = g.astype(jnp.float32) * jax.lax.rsqrt(var + EPS)
        shift = be.astype(jnp.float32) - mean * scale
        return lane(scale), lane(shift)

    # ---- pass 1: conv1 (single fused matmul) + per-image sum / sum-sq ----
    y1, st1 = pl.pallas_call(
        _make_conv1_kernel(H, WCin, WCout),
        grid=(N,),
        in_specs=[img_in(WCin), const2d(3 * WCin, WCout)],
        out_specs=(img_in(WCout), stat_out),
        out_shape=(jax.ShapeDtypeStruct((N, H, WCout), jnp.bfloat16),
                   jax.ShapeDtypeStruct((N, 2, WCout), jnp.float32)),
        compiler_params=cparams,
    )(x_rows, t1)
    sc1, sh1 = bn_affine(st1, g1, be1)   # conv bias b1 cancelled by BN mean

    # ---- pass 2: bn1 affine + relu + conv2 + per-image stats ----
    y2, st2 = pl.pallas_call(
        _make_conv2_kernel(H, WCout),
        grid=(N,),
        in_specs=[img_in(WCout), const2d(1, WCout), const2d(1, WCout),
                  const2d(3 * WCout, WCout)],
        out_specs=(img_in(WCout), stat_out),
        out_shape=(jax.ShapeDtypeStruct((N, H, WCout), jnp.float32),
                   jax.ShapeDtypeStruct((N, 2, WCout), jnp.float32)),
        compiler_params=cparams,
    )(y1, sc1, sh1, t2)
    sc2, sh2 = bn_affine(st2, g2, be2)   # conv bias b2 cancelled by BN mean

    # ---- pass 3: bn2 affine + 1x1 shortcut + residual add + relu ----
    out_rows = pl.pallas_call(
        _make_out_kernel(H, WCin, WCout),
        grid=(N,),
        in_specs=[img_in(WCin), img_in(WCout), const2d(WCin, WCout),
                  const2d(1, WCout), const2d(1, WCout), const2d(1, WCout)],
        out_specs=img_in(WCout),
        out_shape=jax.ShapeDtypeStruct((N, H, WCout), jnp.float32),
        compiler_params=cparams,
    )(x_rows, y2, ws_blk, lane(bs), sc2, sh2)

    return jnp.transpose(out_rows.reshape(N, H, W, Cout), (0, 3, 1, 2))


# ---------------------------------------------------------------------------
# Pure-JAX reference (matches the PyTorch module, train-mode BN)
# ---------------------------------------------------------------------------
def ref_residual_block(x, params):
    (w1, b1, g1, be1, w2, b2, g2, be2, ws, bs) = params

    def conv(x, w, b):
        p = w.shape[2] // 2
        y = jax.lax.conv_general_dilated(
            x, w, window_strides=(1, 1), padding=[(p, p), (p, p)],
            dimension_numbers=('NCHW', 'OIHW', 'NCHW'))
        return y + b[None, :, None, None]

    def bn(x, g, be):
        mean = x.mean(axis=(0, 2, 3), keepdims=True)
        var = ((x - mean) ** 2).mean(axis=(0, 2, 3), keepdims=True)
        return ((x - mean) * jax.lax.rsqrt(var + EPS)
                * g[None, :, None, None] + be[None, :, None, None])

    identity = conv(x, ws, bs)
    out = jax.nn.relu(bn(conv(x, w1, b1), g1, be1))
    out = bn(conv(out, w2, b2), g2, be2)
    return jax.nn.relu(out + identity)


if __name__ == "__main__":
    N, Cin, Cout, H, W = 2, 4, 8, 16, 16
    ks = jax.random.split(jax.random.PRNGKey(0), 12)

    x = jax.random.normal(ks[0], (N, Cin, H, W), jnp.float32)
    w1 = 0.1 * jax.random.normal(ks[1], (Cout, Cin, 3, 3), jnp.float32)
    b1 = 0.1 * jax.random.normal(ks[2], (Cout,), jnp.float32)
    g1 = 1.0 + 0.1 * jax.random.normal(ks[3], (Cout,), jnp.float32)
    be1 = 0.1 * jax.random.normal(ks[4], (Cout,), jnp.float32)
    w2 = 0.1 * jax.random.normal(ks[5], (Cout, Cout, 3, 3), jnp.float32)
    b2 = 0.1 * jax.random.normal(ks[6], (Cout,), jnp.float32)
    g2 = 1.0 + 0.1 * jax.random.normal(ks[7], (Cout,), jnp.float32)
    be2 = 0.1 * jax.random.normal(ks[8], (Cout,), jnp.float32)
    ws = 0.1 * jax.random.normal(ks[9], (Cout, Cin, 1, 1), jnp.float32)
    bs = 0.1 * jax.random.normal(ks[10], (Cout,), jnp.float32)
    params = (w1, b1, g1, be1, w2, b2, g2, be2, ws, bs)

    out = jax.block_until_ready(jax.jit(residual_block)(x, params))
    ref = jax.block_until_ready(ref_residual_block(x, params))

    assert out.shape == (N, Cout, H, W)
    err = float(jnp.max(jnp.abs(out - ref)))
    # bf16 MXU operands (f32 accumulation) vs. pure-f32 reference -> relaxed tol.
    assert jnp.allclose(out, ref, rtol=5e-2, atol=5e-2), err
    print("KERNEL_OK")
</pallas_src>

<mosaic_0001>
module attributes {stable_mosaic.version = 11 : i64} {
  func.func @kernel(%arg0: i32, %arg1: memref<1x16x64xf32, #tpu.memory_space<vmem>>, %arg2: memref<192x128xbf16, #tpu.memory_space<vmem>>, %arg3: memref<1x16x128xbf16, #tpu.memory_space<vmem>>, %arg4: memref<1x2x128xf32, #tpu.memory_space<vmem>>) attributes {dimension_semantics = [#tpu.dimension_semantics<parallel>], iteration_bounds = array<i64: 2>, scalar_prefetch = 0 : i64, scratch_operands = 0 : i64, tpu.core_type = #tpu.core_type<tc>, window_params = [{transform_indices = @transform_0, window_bounds = array<i64: 1, 16, 64>}, {pipeline_mode = #tpu.pipeline_mode<synchronous>, transform_indices = @transform_1, window_bounds = array<i64: 192, 128>}, {transform_indices = @transform_2, window_bounds = array<i64: 1, 16, 128>}, {transform_indices = @transform_3, window_bounds = array<i64: 1, 2, 128>}]} {
    %c0 = arith.constant 0 : index
    %c0_0 = arith.constant 0 : index
    %c0_1 = arith.constant 0 : index
    %0 = vector.load %arg1[%c0, %c0_0, %c0_1] : memref<1x16x64xf32, #tpu.memory_space<vmem>>, vector<1x16x64xf32>
    %1 = vector.shape_cast %0 : vector<1x16x64xf32> to vector<16x64xf32>
    %cst = arith.constant 0.000000e+00 : f32
    %2 = vector.broadcast %cst : f32 to vector<1x64xf32>
    %3 = vector.extract_strided_slice %1 {offsets = [0, 0], sizes = [15, 64], strides = [1, 1]} : vector<16x64xf32> to vector<15x64xf32>
    %4 = tpu.concatenate %2, %3 in 0 : vector<1x64xf32>, vector<15x64xf32> -> vector<16x64xf32>
    %5 = vector.extract_strided_slice %1 {offsets = [1, 0], sizes = [15, 64], strides = [1, 1]} : vector<16x64xf32> to vector<15x64xf32>
    %6 = tpu.concatenate %5, %2 in 0 : vector<15x64xf32>, vector<1x64xf32> -> vector<16x64xf32>
    %7 = tpu.concatenate %4, %1, %6 in 1 : vector<16x64xf32>, vector<16x64xf32>, vector<16x64xf32> -> vector<16x192xf32>
    %8 = arith.truncf %7 : vector<16x192xf32> to vector<16x192xbf16>
    %c0_2 = arith.constant 0 : index
    %c0_3 = arith.constant 0 : index
    %9 = vector.load %arg2[%c0_2, %c0_3] : memref<192x128xbf16, #tpu.memory_space<vmem>>, vector<192x128xbf16>
    %cst_4 = arith.constant dense<0.000000e+00> : vector<16x128xf32>
    %10 = tpu.matmul %8, %9, %cst_4 {dimension_numbers = #tpu.dot_dimension_numbers<[1], [0], [0], [1], [0, 0, 1, 1], [], []>} : vector<16x192xbf16>, vector<192x128xbf16>, vector<16x128xf32> -> vector<16x128xf32>
    %cst_5 = arith.constant dense<0.000000e+00> : vector<128xf32>
    %11 = vector.multi_reduction <add>, %10, %cst_5 [0] : vector<16x128xf32> to vector<128xf32>
    %12 = vector.shape_cast %11 : vector<128xf32> to vector<1x128xf32>
    %13 = arith.mulf %10, %10 : vector<16x128xf32>
    %cst_6 = arith.constant dense<0.000000e+00> : vector<128xf32>
    %14 = vector.multi_reduction <add>, %13, %cst_6 [0] : vector<16x128xf32> to vector<128xf32>
    %15 = vector.shape_cast %14 : vector<128xf32> to vector<1x128xf32>
    %16 = tpu.concatenate %12, %15 in 0 : vector<1x128xf32>, vector<1x128xf32> -> vector<2x128xf32>
    %c0_7 = arith.constant 0 : index
    %c0_8 = arith.constant 0 : index
    %c0_9 = arith.constant 0 : index
    %17 = vector.load %arg4[%c0_7, %c0_8, %c0_9] : memref<1x2x128xf32, #tpu.memory_space<vmem>>, vector<1x2x128xf32>
    %18 = vector.shape_cast %17 : vector<1x2x128xf32> to vector<2x128xf32>
    %19 = vector.shape_cast %16 : vector<2x128xf32> to vector<1x2x128xf32>
    tpu.vector_store %arg4[%c0_7, %c0_8, %c0_9], %19 {strides = array<i32>} : memref<1x2x128xf32, #tpu.memory_space<vmem>>, vector<1x2x128xf32>,
    %20 = arith.truncf %10 : vector<16x128xf32> to vector<16x128xbf16>
    %c0_10 = arith.constant 0 : index
    %c0_11 = arith.constant 0 : index
    %c0_12 = arith.constant 0 : index
    %21 = vector.load %arg3[%c0_10, %c0_11, %c0_12] : memref<1x16x128xbf16, #tpu.memory_space<vmem>>, vector<1x16x128xbf16>
    %22 = vector.shape_cast %21 : vector<1x16x128xbf16> to vector<16x128xbf16>
    %23 = vector.shape_cast %20 : vector<16x128xbf16> to vector<1x16x128xbf16>
    tpu.vector_store %arg3[%c0_10, %c0_11, %c0_12], %23 {strides = array<i32>} : memref<1x16x128xbf16, #tpu.memory_space<vmem>>, vector<1x16x128xbf16>,
    return
  }
  func.func @transform_0(%arg0: i32) -> (i32, i32, i32) {
    %c0_i32 = arith.constant 0 : i32
    %c0_i32_0 = arith.constant 0 : i32
    %c0_i32_1 = arith.constant 0 : i32
    return %arg0, %c0_i32, %c0_i32_0 : i32, i32, i32
  }
  func.func @transform_1(%arg0: i32) -> (i32, i32) {
    %c0_i32 = arith.constant 0 : i32
    %c0_i32_0 = arith.constant 0 : i32
    %c0_i32_1 = arith.constant 0 : i32
    return %c0_i32, %c0_i32_0 : i32, i32
  }
  func.func @transform_2(%arg0: i32) -> (i32, i32, i32) {
    %c0_i32 = arith.constant 0 : i32
    %c0_i32_0 = arith.constant 0 : i32
    %c0_i32_1 = arith.constant 0 : i32
    return %arg0, %c0_i32, %c0_i32_0 : i32, i32, i32
  }
  func.func @transform_3(%arg0: i32) -> (i32, i32, i32) {
    %c0_i32 = arith.constant 0 : i32
    %c0_i32_0 = arith.constant 0 : i32
    %c0_i32_1 = arith.constant 0 : i32
    return %arg0, %c0_i32, %c0_i32_0 : i32, i32, i32
  }
}

module attributes {stable_mosaic.version = 11 : i64} {
  func.func @kernel(%arg0: i32, %arg1: memref<1x16x128xbf16, #tpu.memory_space<vmem>>, %arg2: memref<1x128xf32, #tpu.memory_space<vmem>>, %arg3: memref<1x128xf32, #tpu.memory_space<vmem>>, %arg4: memref<384x128xbf16, #tpu.memory_space<vmem>>, %arg5: memref<1x16x128xf32, #tpu.memory_space<vmem>>, %arg6: memref<1x2x128xf32, #tpu.memory_space<vmem>>) attributes {dimension_semantics = [#tpu.dimension_semantics<parallel>], iteration_bounds = array<i64: 2>, scalar_prefetch = 0 : i64, scratch_operands = 0 : i64, tpu.core_type = #tpu.core_type<tc>, window_params = [{transform_indices = @transform_0, window_bounds = array<i64: 1, 16, 128>}, {pipeline_mode = #tpu.pipeline_mode<synchronous>, transform_indices = @transform_1, window_bounds = array<i64: 1, 128>}, {pipeline_mode = #tpu.pipeline_mode<synchronous>, transform_indices = @transform_2, window_bounds = array<i64: 1, 128>}, {pipeline_mode = #tpu.pipeline_mode<synchronous>, transform_indices = @transform_3, window_bounds = array<i64: 384, 128>}, {transform_indices = @transform_4, window_bounds = array<i64: 1, 16, 128>}, {transform_indices = @transform_5, window_bounds = array<i64: 1, 2, 128>}]} {
    %c0 = arith.constant 0 : index
    %c0_0 = arith.constant 0 : index
    %c0_1 = arith.constant 0 : index
    %0 = vector.load %arg1[%c0, %c0_0, %c0_1] : memref<1x16x128xbf16, #tpu.memory_space<vmem>>, vector<1x16x128xbf16>
    %1 = vector.shape_cast %0 : vector<1x16x128xbf16> to vector<16x128xbf16>
    %2 = arith.extf %1 : vector<16x128xbf16> to vector<16x128xf32>
    %c0_2 = arith.constant 0 : index
    %c0_3 = arith.constant 0 : index
    %3 = vector.load %arg2[%c0_2, %c0_3] : memref<1x128xf32, #tpu.memory_space<vmem>>, vector<1x128xf32>
    %4 = vector.broadcast %3 : vector<1x128xf32> to vector<16x128xf32>
    %5 = arith.mulf %2, %4 : vector<16x128xf32>
    %c0_4 = arith.constant 0 : index
    %c0_5 = arith.constant 0 : index
    %6 = vector.load %arg3[%c0_4, %c0_5] : memref<1x128xf32, #tpu.memory_space<vmem>>, vector<1x128xf32>
    %7 = vector.broadcast %6 : vector<1x128xf32> to vector<16x128xf32>
    %8 = arith.addf %5, %7 : vector<16x128xf32>
    %cst = arith.constant 0.000000e+00 : f32
    %9 = vector.broadcast %cst : f32 to vector<16x128xf32>
    %10 = arith.maximumf %8, %9 : vector<16x128xf32>
    %cst_6 = arith.constant 0.000000e+00 : f32
    %11 = vector.broadcast %cst_6 : f32 to vector<1x128xf32>
    %12 = vector.extract_strided_slice %10 {offsets = [0, 0], sizes = [15, 128], strides = [1, 1]} : vector<16x128xf32> to vector<15x128xf32>
    %13 = tpu.concatenate %11, %12 in 0 : vector<1x128xf32>, vector<15x128xf32> -> vector<16x128xf32>
    %14 = vector.extract_strided_slice %10 {offsets = [1, 0], sizes = [15, 128], strides = [1, 1]} : vector<16x128xf32> to vector<15x128xf32>
    %15 = tpu.concatenate %14, %11 in 0 : vector<15x128xf32>, vector<1x128xf32> -> vector<16x128xf32>
    %16 = tpu.concatenate %13, %10, %15 in 1 : vector<16x128xf32>, vector<16x128xf32>, vector<16x128xf32> -> vector<16x384xf32>
    %17 = arith.truncf %16 : vector<16x384xf32> to vector<16x384xbf16>
    %c0_7 = arith.constant 0 : index
    %c0_8 = arith.constant 0 : index
    %18 = vector.load %arg4[%c0_7, %c0_8] : memref<384x128xbf16, #tpu.memory_space<vmem>>, vector<384x128xbf16>
    %cst_9 = arith.constant dense<0.000000e+00> : vector<16x128xf32>
    %19 = tpu.matmul %17, %18, %cst_9 {dimension_numbers = #tpu.dot_dimension_numbers<[1], [0], [0], [1], [0, 0, 1, 1], [], []>} : vector<16x384xbf16>, vector<384x128xbf16>, vector<16x128xf32> -> vector<16x128xf32>
    %cst_10 = arith.constant dense<0.000000e+00> : vector<128xf32>
    %20 = vector.multi_reduction <add>, %19, %cst_10 [0] : vector<16x128xf32> to vector<128xf32>
    %21 = vector.shape_cast %20 : vector<128xf32> to vector<1x128xf32>
    %22 = arith.mulf %19, %19 : vector<16x128xf32>
    %cst_11 = arith.constant dense<0.000000e+00> : vector<128xf32>
    %23 = vector.multi_reduction <add>, %22, %cst_11 [0] : vector<16x128xf32> to vector<128xf32>
    %24 = vector.shape_cast %23 : vector<128xf32> to vector<1x128xf32>
    %25 = tpu.concatenate %21, %24 in 0 : vector<1x128xf32>, vector<1x128xf32> -> vector<2x128xf32>
    %c0_12 = arith.constant 0 : index
    %c0_13 = arith.constant 0 : index
    %c0_14 = arith.constant 0 : index
    %26 = vector.load %arg6[%c0_12, %c0_13, %c0_14] : memref<1x2x128xf32, #tpu.memory_space<vmem>>, vector<1x2x128xf32>
    %27 = vector.shape_cast %26 : vector<1x2x128xf32> to vector<2x128xf32>
    %28 = vector.shape_cast %25 : vector<2x128xf32> to vector<1x2x128xf32>
    tpu.vector_store %arg6[%c0_12, %c0_13, %c0_14], %28 {strides = array<i32>} : memref<1x2x128xf32, #tpu.memory_space<vmem>>, vector<1x2x128xf32>,
    %c0_15 = arith.constant 0 : index
    %c0_16 = arith.constant 0 : index
    %c0_17 = arith.constant 0 : index
    %29 = vector.load %arg5[%c0_15, %c0_16, %c0_17] : memref<1x16x128xf32, #tpu.memory_space<vmem>>, vector<1x16x128xf32>
    %30 = vector.shape_cast %29 : vector<1x16x128xf32> to vector<16x128xf32>
    %31 = vector.shape_cast %19 : vector<16x128xf32> to vector<1x16x128xf32>
    tpu.vector_store %arg5[%c0_15, %c0_16, %c0_17], %31 {strides = array<i32>} : memref<1x16x128xf32, #tpu.memory_space<vmem>>, vector<1x16x128xf32>,
    return
  }
  func.func @transform_0(%arg0: i32) -> (i32, i32, i32) {
    %c0_i32 = arith.constant 0 : i32
    %c0_i32_0 = arith.constant 0 : i32
    %c0_i32_1 = arith.constant 0 : i32
    return %arg0, %c0_i32, %c0_i32_0 : i32, i32, i32
  }
  func.func @transform_1(%arg0: i32) -> (i32, i32) {
    %c0_i32 = arith.constant 0 : i32
    %c0_i32_0 = arith.constant 0 : i32
    %c0_i32_1 = arith.constant 0 : i32
    return %c0_i32, %c0_i32_0 : i32, i32
  }
  func.func @transform_2(%arg0: i32) -> (i32, i32) {
    %c0_i32 = arith.constant 0 : i32
    %c0_i32_0 = arith.constant 0 : i32
    %c0_i32_1 = arith.constant 0 : i32
    return %c0_i32, %c0_i32_0 : i32, i32
  }
  func.func @transform_3(%arg0: i32) -> (i32, i32) {
    %c0_i32 = arith.constant 0 : i32
    %c0_i32_0 = arith.constant 0 : i32
    %c0_i32_1 = arith.constant 0 : i32
    return %c0_i32, %c0_i32_0 : i32, i32
  }
  func.func @transform_4(%arg0: i32) -> (i32, i32, i32) {
    %c0_i32 = arith.constant 0 : i32
    %c0_i32_0 = arith.constant 0 : i32
    %c0_i32_1 = arith.constant 0 : i32
    return %arg0, %c0_i32, %c0_i32_0 : i32, i32, i32
  }
  func.func @transform_5(%arg0: i32) -> (i32, i32, i32) {
    %c0_i32 = arith.constant 0 : i32
    %c0_i32_0 = arith.constant 0 : i32
    %c0_i32_1 = arith.constant 0 : i32
    return %arg0, %c0_i32, %c0_i32_0 : i32, i32, i32
  }
}

module attributes {stable_mosaic.version = 11 : i64} {
  func.func @kernel(%arg0: i32, %arg1: memref<1x16x64xf32, #tpu.memory_space<vmem>>, %arg2: memref<1x16x128xf32, #tpu.memory_space<vmem>>, %arg3: memref<64x128xbf16, #tpu.memory_space<vmem>>, %arg4: memref<1x128xf32, #tpu.memory_space<vmem>>, %arg5: memref<1x128xf32, #tpu.memory_space<vmem>>, %arg6: memref<1x128xf32, #tpu.memory_space<vmem>>, %arg7: memref<1x16x128xf32, #tpu.memory_space<vmem>>) attributes {dimension_semantics = [#tpu.dimension_semantics<parallel>], iteration_bounds = array<i64: 2>, scalar_prefetch = 0 : i64, scratch_operands = 0 : i64, tpu.core_type = #tpu.core_type<tc>, window_params = [{transform_indices = @transform_0, window_bounds = array<i64: 1, 16, 64>}, {transform_indices = @transform_1, window_bounds = array<i64: 1, 16, 128>}, {pipeline_mode = #tpu.pipeline_mode<synchronous>, transform_indices = @transform_2, window_bounds = array<i64: 64, 128>}, {pipeline_mode = #tpu.pipeline_mode<synchronous>, transform_indices = @transform_3, window_bounds = array<i64: 1, 128>}, {pipeline_mode = #tpu.pipeline_mode<synchronous>, transform_indices = @transform_4, window_bounds = array<i64: 1, 128>}, {pipeline_mode = #tpu.pipeline_mode<synchronous>, transform_indices = @transform_5, window_bounds = array<i64: 1, 128>}, {transform_indices = @transform_6, window_bounds = array<i64: 1, 16, 128>}]} {
    %c0 = arith.constant 0 : index
    %c0_0 = arith.constant 0 : index
    %c0_1 = arith.constant 0 : index
    %0 = vector.load %arg1[%c0, %c0_0, %c0_1] : memref<1x16x64xf32, #tpu.memory_space<vmem>>, vector<1x16x64xf32>
    %1 = vector.shape_cast %0 : vector<1x16x64xf32> to vector<16x64xf32>
    %2 = arith.truncf %1 : vector<16x64xf32> to vector<16x64xbf16>
    %c0_2 = arith.constant 0 : index
    %c0_3 = arith.constant 0 : index
    %3 = vector.load %arg3[%c0_2, %c0_3] : memref<64x128xbf16, #tpu.memory_space<vmem>>, vector<64x128xbf16>
    %cst = arith.constant dense<0.000000e+00> : vector<16x128xf32>
    %4 = tpu.matmul %2, %3, %cst {dimension_numbers = #tpu.dot_dimension_numbers<[1], [0], [0], [1], [0, 0, 1, 1], [], []>} : vector<16x64xbf16>, vector<64x128xbf16>, vector<16x128xf32> -> vector<16x128xf32>
    %c0_4 = arith.constant 0 : index
    %c0_5 = arith.constant 0 : index
    %5 = vector.load %arg4[%c0_4, %c0_5] : memref<1x128xf32, #tpu.memory_space<vmem>>, vector<1x128xf32>
    %6 = vector.broadcast %5 : vector<1x128xf32> to vector<16x128xf32>
    %7 = arith.addf %4, %6 : vector<16x128xf32>
    %c0_6 = arith.constant 0 : index
    %c0_7 = arith.constant 0 : index
    %c0_8 = arith.constant 0 : index
    %8 = vector.load %arg2[%c0_6, %c0_7, %c0_8] : memref<1x16x128xf32, #tpu.memory_space<vmem>>, vector<1x16x128xf32>
    %9 = vector.shape_cast %8 : vector<1x16x128xf32> to vector<16x128xf32>
    %c0_9 = arith.constant 0 : index
    %c0_10 = arith.constant 0 : index
    %10 = vector.load %arg5[%c0_9, %c0_10] : memref<1x128xf32, #tpu.memory_space<vmem>>, vector<1x128xf32>
    %11 = vector.broadcast %10 : vector<1x128xf32> to vector<16x128xf32>
    %12 = arith.mulf %9, %11 : vector<16x128xf32>
    %c0_11 = arith.constant 0 : index
    %c0_12 = arith.constant 0 : index
    %13 = vector.load %arg6[%c0_11, %c0_12] : memref<1x128xf32, #tpu.memory_space<vmem>>, vector<1x128xf32>
    %14 = vector.broadcast %13 : vector<1x128xf32> to vector<16x128xf32>
    %15 = arith.addf %12, %14 : vector<16x128xf32>
    %16 = arith.addf %15, %7 : vector<16x128xf32>
    %cst_13 = arith.constant 0.000000e+00 : f32
    %17 = vector.broadcast %cst_13 : f32 to vector<16x128xf32>
    %18 = arith.maximumf %16, %17 : vector<16x128xf32>
    %c0_14 = arith.constant 0 : index
    %c0_15 = arith.constant 0 : index
    %c0_16 = arith.constant 0 : index
    %19 = vector.load %arg7[%c0_14, %c0_15, %c0_16] : memref<1x16x128xf32, #tpu.memory_space<vmem>>, vector<1x16x128xf32>
    %20 = vector.shape_cast %19 : vector<1x16x128xf32> to vector<16x128xf32>
    %21 = vector.shape_cast %18 : vector<16x128xf32> to vector<1x16x128xf32>
    tpu.vector_store %arg7[%c0_14, %c0_15, %c0_16], %21 {strides = array<i32>} : memref<1x16x128xf32, #tpu.memory_space<vmem>>, vector<1x16x128xf32>,
    return
  }
  func.func @transform_0(%arg0: i32) -> (i32, i32, i32) {
    %c0_i32 = arith.constant 0 : i32
    %c0_i32_0 = arith.constant 0 : i32
    %c0_i32_1 = arith.constant 0 : i32
    return %arg0, %c0_i32, %c0_i32_0 : i32, i32, i32
  }
  func.func @transform_1(%arg0: i32) -> (i32, i32, i32) {
    %c0_i32 = arith.constant 0 : i32
    %c0_i32_0 = arith.constant 0 : i32
    %c0_i32_1 = arith.constant 0 : i32
    return %arg0, %c0_i32, %c0_i32_0 : i32, i32, i32
  }
  func.func @transform_2(%arg0: i32) -> (i32, i32) {
    %c0_i32 = arith.constant 0 : i32
    %c0_i32_0 = arith.constant 0 : i32
    %c0_i32_1 = arith.constant 0 : i32
    return %c0_i32, %c0_i32_0 : i32, i32
  }
  func.func @transform_3(%arg0: i32) -> (i32, i32) {
    %c0_i32 = arith.constant 0 : i32
    %c0_i32_0 = arith.constant 0 : i32
    %c0_i32_1 = arith.constant 0 : i32
    return %c0_i32, %c0_i32_0 : i32, i32
  }
  func.func @transform_4(%arg0: i32) -> (i32, i32) {
    %c0_i32 = arith.constant 0 : i32
    %c0_i32_0 = arith.constant 0 : i32
    %c0_i32_1 = arith.constant 0 : i32
    return %c0_i32, %c0_i32_0 : i32, i32
  }
  func.func @transform_5(%arg0: i32) -> (i32, i32) {
    %c0_i32 = arith.constant 0 : i32
    %c0_i32_0 = arith.constant 0 : i32
    %c0_i32_1 = arith.constant 0 : i32
    return %c0_i32, %c0_i32_0 : i32, i32
  }
  func.func @transform_6(%arg0: i32) -> (i32, i32, i32) {
    %c0_i32 = arith.constant 0 : i32
    %c0_i32_0 = arith.constant 0 : i32
    %c0_i32_1 = arith.constant 0 : i32
    return %arg0, %c0_i32, %c0_i32_0 : i32, i32, i32
  }
}

</mosaic_0001>

<llo_original>
// kernel: tile.28
$region0: #{tile.28}
  #allocation0 [shape = 's32[1]{0}', space=sflag, size = 0x4, scoped, tag = 'scoped memory for tile.28']
  %s0 = inlined_call_operand.vmem [shape: f32[8], index: 0, kind: input, shape index: {}]
  %s1 = inlined_call_operand.vmem [shape: f32[16,8], index: 1, kind: output, shape index: {}]
  // Predicated region
  $region2: #{tile.28} parent=0 // pred_check
    _
  $region3: #{tile.28} parent=0 // pred_check_branch
    %3 = sbr.rel (0) target = $region5
  $region4: #{tile.28} parent=0 // pred_region
    _
  $region5: #{tile.28} parent=0 // pred_fallthru
    _
  %v4 = vld [vmem:[%s0] ss:$0 sm:$0xff]
  %5 = vst [vmem:[%s1] sm:$0xff] %v4
  %s6 = scalar_lea.vmem %s1, 8
  %7 = vst [vmem:[%s6] sm:$0xff] %v4

// kernel: tile.29
$region0: #{tile.29}
  %s0 = inlined_call_operand.vmem [shape: f32[16,8], index: 0, kind: input, shape index: {}]
  %s1 = inlined_call_operand.vmem [shape: f32[1,128], index: 1, kind: output, shape index: {}]
  $region1: #{tile.29} parent=0
    #allocation0 [shape = 'u8[4096]{0}', space=vmem, size = 0x1000, scoped, tag = 'scoped mem for output reshape']
    %v2 = vld [vmem:[%s0] sm:$0x1]
    %vm3 = vcmask 64512
    %4 = vst.msk [vmem:[#allocation0] sm:$0x1] %vm3, %v2
    %s5 = scalar_lea.vmem %s0, 15
    %v6 = vld [vmem:[%s5] sm:$0x1]
    %7 = vrot.lane.b32.xlu0 %v6, 120
    %v8 = vpop.permute.xlu0 %7
    %vm9 = vcmask 1048512
    %10 = vst.msk [vmem:[#allocation0] sm:$0x1] %vm9, %v8
    %s11 = scalar_lea.vmem %s0, 14
    %v12 = vld [vmem:[%s11] sm:$0x1]
    %13 = vrot.lane.b32.xlu0 %v12, 112
    %v14 = vpop.permute.xlu0 %13
    %vm15 = vcmask 982912
    %16 = vst.msk [vmem:[#allocation0] sm:$0x1] %vm15, %v14
    %s17 = scalar_lea.vmem %s0, 13
    %v18 = vld [vmem:[%s17] sm:$0x1]
    %19 = vrot.lane.b32.xlu0 %v18, 104
    %v20 = vpop.permute.xlu0 %19
    %vm21 = vcmask 917312
    %22 = vst.msk [vmem:[#allocation0] sm:$0x1] %vm21, %v20
    %s23 = scalar_lea.vmem %s0, 12
    %v24 = vld [vmem:[%s23] sm:$0x1]
    %25 = vrot.lane.b32.xlu0 %v24, 96
    %v26 = vpop.permute.xlu0 %25
    %vm27 = vcmask 851712
    %28 = vst.msk [vmem:[#allocation0] sm:$0x1] %vm27, %v26
    %s29 = scalar_lea.vmem %s0, 11
    %v30 = vld [vmem:[%s29] sm:$0x1]
    %31 = vrot.lane.b32.xlu0 %v30, 88
    %v32 = vpop.permute.xlu0 %31
    %vm33 = vcmask 786112
    %34 = vst.msk [vmem:[#allocation0] sm:$0x1] %vm33, %v32
    %s35 = scalar_lea.vmem %s0, 10
    %v36 = vld [vmem:[%s35] sm:$0x1]
    %37 = vrot.lane.b32.xlu0 %v36, 80
    %v38 = vpop.permute.xlu0 %37
    %vm39 = vcmask 720512
    %40 = vst.msk [vmem:[#allocation0] sm:$0x1] %vm39, %v38
    %s41 = scalar_lea.vmem %s0, 9
    %v42 = vld [vmem:[%s41] sm:$0x1]
    %43 = vrot.lane.b32.xlu0 %v42, 72
    %v44 = vpop.permute.xlu0 %43
    %vm45 = vcmask 654912
    %46 = vst.msk [vmem:[#allocation0] sm:$0x1] %vm45, %v44
    %s47 = scalar_lea.vmem %s0, 8
    %v48 = vld [vmem:[%s47] sm:$0x1]
    %49 = vrot.lane.b32.xlu0 %v48, 64
    %v50 = vpop.permute.xlu0 %49
    %vm51 = vcmask 589312
    %52 = vst.msk [vmem:[#allocation0] sm:$0x1] %vm51, %v50
    %s53 = scalar_lea.vmem %s0, 7
    %v54 = vld [vmem:[%s53] sm:$0x1]
    %55 = vrot.lane.b32.xlu0 %v54, 56
    %v56 = vpop.permute.xlu0 %55
    %vm57 = vcmask 523712
    %58 = vst.msk [vmem:[#allocation0] sm:$0x1] %vm57, %v56
    %s59 = scalar_lea.vmem %s0, 6
    %v60 = vld [vmem:[%s59] sm:$0x1]
    %61 = vrot.lane.b32.xlu0 %v60, 48
    %v62 = vpop.permute.xlu0 %61
    %vm63 = vcmask 458112
    %64 = vst.msk [vmem:[#allocation0] sm:$0x1] %vm63, %v62
    %s65 = scalar_lea.vmem %s0, 5
    %v66 = vld [vmem:[%s65] sm:$0x1]
    %67 = vrot.lane.b32.xlu0 %v66, 40
    %v68 = vpop.permute.xlu0 %67
    %vm69 = vcmask 392512
    %70 = vst.msk [vmem:[#allocation0] sm:$0x1] %vm69, %v68
    %s71 = scalar_lea.vmem %s0, 4
    %v72 = vld [vmem:[%s71] sm:$0x1]
    %73 = vrot.lane.b32.xlu0 %v72, 32
    %v74 = vpop.permute.xlu0 %73
    %vm75 = vcmask 326912
    %76 = vst.msk [vmem:[#allocation0] sm:$0x1] %vm75, %v74
    %s77 = scalar_lea.vmem %s0, 3
    %v78 = vld [vmem:[%s77] sm:$0x1]
    %79 = vrot.lane.b32.xlu0 %v78, 24
    %v80 = vpop.permute.xlu0 %79
    %vm81 = vcmask 261312
    %82 = vst.msk [vmem:[#allocation0] sm:$0x1] %vm81, %v80
    %s83 = scalar_lea.vmem %s0, 2
    %v84 = vld [vmem:[%s83] sm:$0x1]
    %85 = vrot.lane.b32.xlu0 %v84, 16
    %v86 = vpop.permute.xlu0 %85
    %vm87 = vcmask 195712
    %88 = vst.msk [vmem:[#allocation0] sm:$0x1] %vm87, %v86
    %s89 = scalar_lea.vmem %s0, 1
    %v90 = vld [vmem:[%s89] sm:$0x1]
    %91 = vrot.lane.b32.xlu0 %v90, 8
    %v92 = vpop.permute.xlu0 %91
    %vm93 = vcmask 130112
    %94 = vst.msk [vmem:[#allocation0] sm:$0x1] %vm93, %v92
    %s96 = sshll.u32 1, 1
    %s97 = ssub.s32 %s96, 1
    %v99 = vld [vmem:[#allocation0] sm:%s97]
    %s100 = sshll.u32 1, 1
    %s101 = ssub.s32 %s100, 1
    %102 = vst [vmem:[%s1] sm:%s101] %v99

// kernel: residual_block.3
$region0: #{residual_block.3}
  #allocation0 [shape = 'u32[]', space=smem, size = 0x4, offset = 0x4, fixed_abs, tag = 'smem constant byte address 0x4 - core index']
  #allocation1 [shape = 'u32[144,128]{1,0:T(1,128)}', space=vmem, size = 0x12000, scoped, tag = 'internal scratch']
  %s0 = inlined_call_operand.vmem [shape: f32[2,16,64], index: 0, kind: input, shape index: {}]
  %s1 = inlined_call_operand.vmem [shape: bf16[192,128], index: 1, kind: input, shape index: {}]
  %s2 = inlined_call_operand.vmem [shape: bf16[2,16,128], index: 2, kind: output, shape index: {0}]
  %s3 = inlined_call_operand.vmem [shape: f32[2,2,128], index: 3, kind: output, shape index: {1}]
  %4 = xla_tuple %s2, %s3
  %s5 = sld [smem:[#allocation0]]
  $region49: #{residual_block.3} parent=0
    _
  %s7 = ssub.s32 1, %s5
  %s8 = scalar_select 0, %s7, %s5
  loop: start=0, step=1, limit=4
  $region2: #{residual_block.3} parent=0 // loop_pre_header
    _
  $region3: #{residual_block.3} parent=0 // loop_header
    %s10 = sphi 0, %s14
    %p11 = scmp.ge.s32.totalorder %s10, 4
    %s20 = sphi 0, %s22
    %s23 = sphi 0, %s20
    %s24 = sphi 0, %s23
    %s40 = sphi 0, %s24
    %s44 = sphi 0, %s44
    %s46 = sphi 0, %s44
    %s47 = sphi 0, %s46
    %s61 = sphi 0, %s47
    %s67 = sphi 0, %s69
    %s70 = sphi 0, %s67
    %s71 = sphi 0, %s70
    %s87 = sphi 0, %s71
    %s93 = sphi 0, %s95
    %s96 = sphi 0, %s93
    %s97 = sphi 0, %s96
    %s113 = sphi 0, %s97
  $region4: #{residual_block.3} parent=0 // loop_header_branch
    %13 = sbr.rel (%p11) target = $region8
  $region5: #{residual_block.3} parent=0 // loop_body
    %s15 = ssub.s32 %s10, 1
    %s16 = ssub.s32 %s10, 2
    %s17 = sadd.s32 %s10, 1
    %s18 = ssub.s32 %s10, %s17
    %p19 = scmp.eq.s32.totalorder %s18, 0
    %s21 = sadd.s32 %s20, 1
    %s22 = scalar_select %p19, %s20, %s21
    %p25 = pneg %p19
    %p26 = scmp.eq.s32.totalorder %s10, 1
    %p27 = por %p25, %p26
    %p28 = scmp.ne.s32.totalorder %s20, %s23
    %p29 = scmp.eq.s32.totalorder %s10, 0
    %p30 = por %p28, %p29
    %p31 = scmp.ne.s32.totalorder %s20, %s23
    %p32 = scmp.eq.s32.totalorder %s15, 1
    %p33 = por %p31, %p32
    %p34 = scmp.ne.s32.totalorder %s23, %s24
    %p35 = scmp.eq.s32.totalorder %s15, 0
    %p36 = por %p34, %p35
    %p37 = scmp.ne.s32.totalorder %s23, %s24
    %p38 = scmp.eq.s32.totalorder %s16, 1
    %p39 = por %p37, %p38
    %p41 = scmp.ne.s32.totalorder %s24, %s40
    %p42 = scmp.eq.s32.totalorder %s16, 0
    %p43 = por %p41, %p42
    %s45 = sadd.s32 %s44, 1
    %p48 = scmp.eq.s32.totalorder %s10, 1
    %p49 = scmp.ne.s32.totalorder %s44, %s46
    %p50 = scmp.eq.s32.totalorder %s10, 0
    %p51 = por %p49, %p50
    %p52 = scmp.ne.s32.totalorder %s44, %s46
    %p53 = scmp.eq.s32.totalorder %s15, 1
    %p54 = por %p52, %p53
    %p55 = scmp.ne.s32.totalorder %s46, %s47
    %p56 = scmp.eq.s32.totalorder %s15, 0
    %p57 = por %p55, %p56
    %p58 = scmp.ne.s32.totalorder %s46, %s47
    %p59 = scmp.eq.s32.totalorder %s16, 1
    %p60 = por %p58, %p59
    %p62 = scmp.ne.s32.totalorder %s47, %s61
    %p63 = scmp.eq.s32.totalorder %s16, 0
    %p64 = por %p62, %p63
    %s65 = ssub.s32 %s10, %s17
    %p66 = scmp.eq.s32.totalorder %s65, 0
    %s68 = sadd.s32 %s67, 1
    %s69 = scalar_select %p66, %s67, %s68
    %p72 = pneg %p66
    %p73 = scmp.eq.s32.totalorder %s10, 1
    %p74 = por %p72, %p73
    %p75 = scmp.ne.s32.totalorder %s67, %s70
    %p76 = scmp.eq.s32.totalorder %s10, 0
    %p77 = por %p75, %p76
    %p78 = scmp.ne.s32.totalorder %s67, %s70
    %p79 = scmp.eq.s32.totalorder %s15, 1
    %p80 = por %p78, %p79
    %p81 = scmp.ne.s32.totalorder %s70, %s71
    %p82 = scmp.eq.s32.totalorder %s15, 0
    %p83 = por %p81, %p82
    %p84 = scmp.ne.s32.totalorder %s70, %s71
    %p85 = scmp.eq.s32.totalorder %s16, 1
    %p86 = por %p84, %p85
    %p88 = scmp.ne.s32.totalorder %s71, %s87
    %p89 = scmp.eq.s32.totalorder %s16, 0
    %p90 = por %p88, %p89
    %s91 = ssub.s32 %s10, %s17
    %p92 = scmp.eq.s32.totalorder %s91, 0
    %s94 = sadd.s32 %s93, 1
    %s95 = scalar_select %p92, %s93, %s94
    %p98 = pneg %p92
    %p99 = scmp.eq.s32.totalorder %s10, 1
    %p100 = por %p98, %p99
    %p101 = scmp.ne.s32.totalorder %s93, %s96
    %p102 = scmp.eq.s32.totalorder %s10, 0
    %p103 = por %p101, %p102
    %p104 = scmp.ne.s32.totalorder %s93, %s96
    %p105 = scmp.eq.s32.totalorder %s15, 1
    %p106 = por %p104, %p105
    %p107 = scmp.ne.s32.totalorder %s96, %s97
    %p108 = scmp.eq.s32.totalorder %s15, 0
    %p109 = por %p107, %p108
    %p110 = scmp.ne.s32.totalorder %s96, %s97
    %p111 = scmp.eq.s32.totalorder %s16, 1
    %p112 = por %p110, %p111
    %p114 = scmp.ne.s32.totalorder %s97, %s113
    %p115 = scmp.eq.s32.totalorder %s16, 0
    %p116 = por %p114, %p115
    %p117 = scmp.le.s32.totalorder 1, %s10
    %p118 = scmp.lt.s32.totalorder %s10, 3
    %p119 = pnand %p117, %p118
    %p120 = pneg %p119
    // Predicated region
    $region9: #{residual_block.3} parent=5 // pred_check
      _
    $region10: #{residual_block.3} parent=5 // pred_check_branch
      %122 = sbr.rel (%p119) target = $region12
    $region11: #{residual_block.3} parent=5 // pred_region
      %s123 = ssub.s32 %s10, 1
      // Predicated region
      $region13: #{residual_block.3} parent=11 // pred_check
        %p124 = pneg %p57
      $region14: #{residual_block.3} parent=11 // pred_check_branch
        %126 = sbr.rel (%p124) target = $region16
      $region15: #{residual_block.3} parent=11 // pred_region
        _
      $region16: #{residual_block.3} parent=11 // pred_fallthru
        _
    $region12: #{residual_block.3} parent=5 // pred_fallthru
      _
    %p127 = scmp.lt.s32.totalorder %s10, 2
    // Predicated region
    $region17: #{residual_block.3} parent=5 // pred_check
      %p128 = pneg %p127
    $region18: #{residual_block.3} parent=5 // pred_check_branch
      %130 = sbr.rel (%p128) target = $region20
    $region19: #{residual_block.3} parent=5 // pred_region
      // Predicated region
      $region21: #{residual_block.3} parent=19 // pred_check
        %p131 = pneg %p30
      $region22: #{residual_block.3} parent=19 // pred_check_branch
        %133 = sbr.rel (%p131) target = $region24
      $region23: #{residual_block.3} parent=19 // pred_region
        %p134 = scmp.lt.s32.totalorder %s10, 1
        %s135 = scalar_select %p134, %s10, 1
        %s136 = smul.addr %s135, 2
        %s137 = smul.addr %s136, 8
        %s138 = scalar_lea.vmem %s0, %s137
      $region24: #{residual_block.3} parent=19 // pred_fallthru
        _
    $region20: #{residual_block.3} parent=5 // pred_fallthru
      _
    %p139 = scmp.le.s32.totalorder 1, %s10
    %p140 = scmp.lt.s32.totalorder %s10, 3
    %p141 = pnand %p139, %p140
    %p142 = pneg %p141
    // Predicated region
    $region25: #{residual_block.3} parent=5 // pred_check
      _
    $region26: #{residual_block.3} parent=5 // pred_check_branch
      %144 = sbr.rel (%p141) target = $region28
    $region27: #{residual_block.3} parent=5 // pred_region
      %s145 = ssub.s32 %s10, 1
      %p146 = scmp.lt.s32.totalorder %s15, 1
      %s147 = scalar_select %p146, %s15, 1
      %s148 = smul.addr %s147, 2
      %s149 = smul.addr %s148, 8
      %s150 = scalar_lea.vmem %s0, %s149
      %p151 = pneg %p36
      %p152 = pneg %p33
      %p153 = pneg %p57
      %p154 = pneg %p54
      %p155 = pneg %p83
      %p156 = pneg %p80
      %p157 = scmp.lt.s32.totalorder %s15, 1
      %s158 = scalar_select %p157, %s15, 1
      %s159 = smul.addr %s158, 2
      %s160 = smul.addr %s159, 4
      %s161 = scalar_lea.vmem %s2, %s160
      %p162 = pneg %p109
      %p163 = pneg %p106
      %p164 = scmp.lt.s32.totalorder %s15, 1
      %s165 = scalar_select %p164, %s15, 1
      %s166 = smul.addr %s165, 2
      %s167 = scalar_lea.vmem %s3, %s166
      %p168 = scmp.lt.s32.totalorder %s15, 1
      %s169 = scalar_select %p168, %s15, 1
      %s170 = smul.addr %s169, 2
      %s171 = smul.addr %s170, 8
      %s172 = scalar_lea.vmem %s0, %s171
      %p173 = scmp.lt.s32.totalorder %s15, 1
      %s174 = scalar_select %p173, %s15, 1
      %s175 = smul.addr %s174, 2
      %s176 = smul.addr %s175, 4
      %s177 = scalar_lea.vmem %s2, %s176
      %p178 = scmp.lt.s32.totalorder %s15, 1
      %s179 = scalar_select %p178, %s15, 1
      %s180 = smul.addr %s179, 2
      %s181 = scalar_lea.vmem %s3, %s180
      %v183 = vld [vmem:[%s172] sm:$0xff]
      %v184 = vld [vmem:[%s172 + $0x8] sm:$0xff]
      %vm187 = vcmask 1040384
      %v188 = vrot.slane %v183, 7
      %v189 = vrot.slane %v184, 7
      %v190 = vsel %vm187, %v188, %v189
      %v193 = vsel %vm187, 0.0, %v188
      %vm194 = vcmask 1046528
      %v195 = vrot.slane %v183, 1
      %v196 = vrot.slane %v184, 1
      %v197 = vsel %vm194, %v195, %v196
      %v200 = vsel %vm194, %v196, 0.0
      %201 = vrot.lane.b32.xlu0 %v183, 64
      %v202 = vpop.permute.xlu0 %201
      %203 = vrot.lane.b32.xlu0 %v184, 64
      %v204 = vpop.permute.xlu0 %203
      %vm207 = vcmask 523264
      %v208 = vsel %vm207, %v193, %v202
      %v209 = vsel %vm207, %v190, %v204
      %v210 = vpack.c.bf16 %v209, %v208
      %v211 = vpack.c.bf16 %v200, %v197
      %v212 = vld [vmem:[%s1] sm:$0xf]
      %v213 = vld [vmem:[%s1 + $0x4] sm:$0xf]
      %v214 = vld [vmem:[%s1 + $0x8] sm:$0xf]
      %v215 = vld [vmem:[%s1 + $0xc] sm:$0xf]
      %v216 = vld [vmem:[%s1 + $0x10] sm:$0xf]
      %v217 = vld [vmem:[%s1 + $0x14] sm:$0xf]
      %v218 = vld [vmem:[%s1 + $0x18] sm:$0xf]
      %v219 = vld [vmem:[%s1 + $0x1c] sm:$0xf]
      %v220 = vld [vmem:[%s1 + $0x20] sm:$0xf]
      %v221 = vld [vmem:[%s1 + $0x24] sm:$0xf]
      %v222 = vld [vmem:[%s1 + $0x28] sm:$0xf]
      %v223 = vld [vmem:[%s1 + $0x2c] sm:$0xf]
      %v224 = vld [vmem:[%s1 + $0x30] sm:$0xf]
      %v225 = vld [vmem:[%s1 + $0x34] sm:$0xf]
      %v226 = vld [vmem:[%s1 + $0x38] sm:$0xf]
      %v227 = vld [vmem:[%s1 + $0x3c] sm:$0xf]
      %v228 = vld [vmem:[%s1 + $0x40] sm:$0xf]
      %v229 = vld [vmem:[%s1 + $0x44] sm:$0xf]
      %v230 = vld [vmem:[%s1 + $0x48] sm:$0xf]
      %v231 = vld [vmem:[%s1 + $0x4c] sm:$0xf]
      %v232 = vld [vmem:[%s1 + $0x50] sm:$0xf]
      %v233 = vld [vmem:[%s1 + $0x54] sm:$0xf]
      %v234 = vld [vmem:[%s1 + $0x58] sm:$0xf]
      %v235 = vld [vmem:[%s1 + $0x5c] sm:$0xf]
      %v260 = vunpack.c.l.b16 %v212
      %v261 = vunpack.c.l.b16 %v213
      %v262 = vunpack.c.l.b16 %v214
      %v263 = vunpack.c.l.b16 %v215
      %v264 = vunpack.c.l.b16 %v216
      %v265 = vunpack.c.l.b16 %v217
      %v266 = vunpack.c.l.b16 %v218
      %v267 = vunpack.c.l.b16 %v219
      %v268 = vunpack.c.l.b16 %v220
      %v269 = vunpack.c.l.b16 %v221
      %v270 = vunpack.c.l.b16 %v222
      %v271 = vunpack.c.l.b16 %v223
      %v272 = vunpack.c.l.b16 %v224
      %v273 = vunpack.c.l.b16 %v225
      %v274 = vunpack.c.l.b16 %v226
      %v275 = vunpack.c.l.b16 %v227
      %v276 = vunpack.c.l.b16 %v228
      %v277 = vunpack.c.l.b16 %v229
      %v278 = vunpack.c.l.b16 %v230
      %v279 = vunpack.c.l.b16 %v231
      %v280 = vunpack.c.l.b16 %v232
      %v281 = vunpack.c.l.b16 %v233
      %v282 = vunpack.c.l.b16 %v234
      %v283 = vunpack.c.l.b16 %v235
      %v284 = vpack.c.b16 %v261, %v260
      %v285 = vpack.c.b16 %v263, %v262
      %v286 = vpack.c.b16 %v265, %v264
      %v287 = vpack.c.b16 %v267, %v266
      %v288 = vpack.c.b16 %v269, %v268
      %v289 = vpack.c.b16 %v271, %v270
      %v290 = vpack.c.b16 %v273, %v272
      %v291 = vpack.c.b16 %v275, %v274
      %v292 = vpack.c.b16 %v277, %v276
      %v293 = vpack.c.b16 %v279, %v278
      %v294 = vpack.c.b16 %v281, %v280
      %v295 = vpack.c.b16 %v283, %v282
      %v309 = vsel %vm207, %v211, 0
      %311 = vmatprep.subr.bf16.mxu0 0
      %312 = vmatpush1.bf16.msra.mxu0 %v291
      %313 = vmatprep.subr.bf16.mxu0 0
      %314 = vmatpush1.bf16.msra.mxu0 %v290
      %315 = vmatprep.subr.bf16.mxu0 0
      %316 = vmatpush1.bf16.msra.mxu0 %v289
      %317 = vmatprep.subr.bf16.mxu0 0
      %318 = vmatpush1.bf16.msra.mxu0 %v288
      %319 = vmatprep.subr.bf16.mxu0 0
      %320 = vmatpush1.bf16.msra.mxu0 %v287
      %321 = vmatprep.subr.bf16.mxu0 0
      %322 = vmatpush1.bf16.msra.mxu0 %v286
      %323 = vmatprep.subr.bf16.mxu0 0
      %324 = vmatpush1.bf16.msra.mxu0 %v285
      %325 = vmatprep.subr.bf16.mxu0 0
      %326 = vmatpush1.bf16.msra.mxu0 %v284
      %327 = vmatprep.subr.bf16.mxu0 0
      %328 = vmatpush2.bf16.msra.mxu0 0
      %329 = vmatprep.subr.bf16.mxu0 0
      %330 = vmatpush2.bf16.msra.mxu0 0
      %331 = vmatprep.subr.bf16.mxu0 0
      %332 = vmatpush2.bf16.msra.mxu0 0
      %333 = vmatprep.subr.bf16.mxu0 0
      %334 = vmatpush2.bf16.msra.mxu0 0
      %335 = vmatprep.subr.bf16.mxu0 0
      %336 = vmatpush2.bf16.msra.mxu0 %v295
      %337 = vmatprep.subr.bf16.mxu0 0
      %338 = vmatpush2.bf16.msra.mxu0 %v294
      %339 = vmatprep.subr.bf16.mxu0 0
      %340 = vmatpush2.bf16.msra.mxu0 %v293
      %341 = vmatprep.subr.bf16.mxu0 0
      %342 = vmatpush2.bf16.msra.mxu0 %v292
      %343 = vmatprep.mubr.bf16.mxu0 %v309
      %344 = vmatmul.mubr.bf16.gmra.mxu0 %v210
      %v345 = vpop.f32.mrf.mxu0
      %v346 = vadd.f32 0.0, %v345
      %v347 = vpop.f32.mrf.mxu0
      %v348 = vpop.f32.mrf.mxu0
      %v349 = vadd.f32 0.0, %v348
      %v350 = vpop.f32.mrf.mxu0
      %351 = vdwg.mxu0
      %v352 = vadd.f32 %v346, %v349
      %v353 = vrot.slane %v352, 4
      %v354 = vadd.f32 %v352, %v353
      %v355 = vrot.slane %v354, 2
      %v356 = vadd.f32 %v354, %v355
      %v357 = vrot.slane %v356, 1
      %v358 = vadd.f32 %v356, %v357
      %v359 = vmul.f32 %v346, %v346
      %v360 = vmul.f32 %v349, %v349
      %v361 = vadd.f32 %v359, %v360
      %v362 = vrot.slane %v361, 4
      %v363 = vadd.f32 %v361, %v362
      %v364 = vrot.slane %v363, 2
      %v365 = vadd.f32 %v363, %v364
      %v366 = vrot.slane %v365, 1
      %v367 = vadd.f32 %v365, %v366
      %v368 = vsel %vm187, %v358, %v367
      %369 = vst [vmem:[%s181] sm:$0x3] %v368
      %v370 = vpack.c.bf16 %v349, %v346
      %v372 = vunpack.c.l.b16 %v370
      %v373 = vunpack.c.h.b16 %v370
      %v374 = vpack.c.b16 %v372, %v372
      %v375 = vpack.c.b16 %v373, %v373
      %378 = vst [vmem:[%s177] sm:$0xf] %v374
      %379 = vst [vmem:[%s177 + $0x4] sm:$0xf] %v375
      %p380 = scmp.lt.s32.totalorder %s15, 1
      %s381 = scalar_select %p380, %s15, 1
      %s382 = smul.addr %s381, 2
      %s383 = smul.addr %s382, 4
      %s384 = scalar_lea.vmem %s2, %s383
      %p385 = scmp.lt.s32.totalorder %s15, 1
      %s386 = scalar_select %p385, %s15, 1
      %s387 = smul.addr %s386, 2
      %s388 = scalar_lea.vmem %s3, %s387
      // Predicated region
      $region29: #{residual_block.3} parent=27 // pred_check
        %p389 = pneg %p80
      $region30: #{residual_block.3} parent=27 // pred_check_branch
        %391 = sbr.rel (%p389) target = $region32
      $region31: #{residual_block.3} parent=27 // pred_region
        _
      $region32: #{residual_block.3} parent=27 // pred_fallthru
        _
      // Predicated region
      $region33: #{residual_block.3} parent=27 // pred_check
        %p392 = pneg %p106
      $region34: #{residual_block.3} parent=27 // pred_check_branch
        %394 = sbr.rel (%p392) target = $region36
      $region35: #{residual_block.3} parent=27 // pred_region
        _
      $region36: #{residual_block.3} parent=27 // pred_fallthru
        _
    $region28: #{residual_block.3} parent=5 // pred_fallthru
      _
    %p395 = scmp.le.s32.totalorder 2, %s10
    // Predicated region
    $region37: #{residual_block.3} parent=5 // pred_check
      %p396 = pneg %p395
    $region38: #{residual_block.3} parent=5 // pred_check_branch
      %398 = sbr.rel (%p396) target = $region40
    $region39: #{residual_block.3} parent=5 // pred_region
      %s399 = ssub.s32 %s10, 2
      // Predicated region
      $region41: #{residual_block.3} parent=39 // pred_check
        %p400 = pneg %p86
      $region42: #{residual_block.3} parent=39 // pred_check_branch
        %402 = sbr.rel (%p400) target = $region44
      $region43: #{residual_block.3} parent=39 // pred_region
        %p403 = scmp.lt.s32.totalorder %s16, 1
        %s404 = scalar_select %p403, %s16, 1
        %s405 = smul.addr %s404, 2
        %s406 = smul.addr %s405, 4
        %s407 = scalar_lea.vmem %s2, %s406
      $region44: #{residual_block.3} parent=39 // pred_fallthru
        _
      // Predicated region
      $region45: #{residual_block.3} parent=39 // pred_check
        %p408 = pneg %p112
      $region46: #{residual_block.3} parent=39 // pred_check_branch
        %410 = sbr.rel (%p408) target = $region48
      $region47: #{residual_block.3} parent=39 // pred_region
        %p411 = scmp.lt.s32.totalorder %s16, 1
        %s412 = scalar_select %p411, %s16, 1
        %s413 = smul.addr %s412, 2
        %s414 = scalar_lea.vmem %s3, %s413
      $region48: #{residual_block.3} parent=39 // pred_fallthru
        _
    $region40: #{residual_block.3} parent=5 // pred_fallthru
      _
  $region6: #{residual_block.3} parent=0 // loop_footer
    %s14 = sadd.s32 1, %s10
  $region7: #{residual_block.3} parent=0 // loop_footer_branch
    %9 = sbr.rel target = $region3
  $region8: #{residual_block.3} parent=0 // loop_exit
    _

// kernel: residual_block.4
$region0: #{residual_block.4}
  #allocation0 [shape = 'u32[]', space=smem, size = 0x4, offset = 0x4, fixed_abs, tag = 'smem constant byte address 0x4 - core index']
  #allocation1 [shape = 'u32[144,128]{1,0:T(1,128)}', space=vmem, size = 0x12000, scoped, tag = 'internal scratch']
  %s0 = inlined_call_operand.vmem [shape: bf16[2,16,128], index: 0, kind: input, shape index: {}]
  %s1 = inlined_call_operand.vmem [shape: f32[1,128], index: 1, kind: input, shape index: {}]
  %s2 = inlined_call_operand.vmem [shape: f32[1,128], index: 2, kind: input, shape index: {}]
  %s3 = inlined_call_operand.vmem [shape: bf16[384,128], index: 3, kind: input, shape index: {}]
  %s4 = inlined_call_operand.vmem [shape: f32[2,16,128], index: 4, kind: output, shape index: {0}]
  %s5 = inlined_call_operand.vmem [shape: f32[2,2,128], index: 5, kind: output, shape index: {1}]
  %6 = xla_tuple %s4, %s5
  %s7 = sld [smem:[#allocation0]]
  $region57: #{residual_block.4} parent=0
    _
  %s9 = ssub.s32 1, %s7
  %s10 = scalar_select 0, %s9, %s7
  loop: start=0, step=1, limit=4
  $region2: #{residual_block.4} parent=0 // loop_pre_header
    _
  $region3: #{residual_block.4} parent=0 // loop_header
    %s12 = sphi 0, %s16
    %p13 = scmp.ge.s32.totalorder %s12, 4
    %s22 = sphi 0, %s24
    %s25 = sphi 0, %s22
    %s26 = sphi 0, %s25
    %s42 = sphi 0, %s26
    %s46 = sphi 0, %s46
    %s48 = sphi 0, %s46
    %s49 = sphi 0, %s48
    %s63 = sphi 0, %s49
    %s67 = sphi 0, %s67
    %s69 = sphi 0, %s67
    %s70 = sphi 0, %s69
    %s84 = sphi 0, %s70
    %s88 = sphi 0, %s88
    %s90 = sphi 0, %s88
    %s91 = sphi 0, %s90
    %s105 = sphi 0, %s91
    %s111 = sphi 0, %s113
    %s114 = sphi 0, %s111
    %s115 = sphi 0, %s114
    %s131 = sphi 0, %s115
    %s137 = sphi 0, %s139
    %s140 = sphi 0, %s137
    %s141 = sphi 0, %s140
    %s157 = sphi 0, %s141
  $region4: #{residual_block.4} parent=0 // loop_header_branch
    %15 = sbr.rel (%p13) target = $region8
  $region5: #{residual_block.4} parent=0 // loop_body
    %s17 = ssub.s32 %s12, 1
    %s18 = ssub.s32 %s12, 2
    %s19 = sadd.s32 %s12, 1
    %s20 = ssub.s32 %s12, %s19
    %p21 = scmp.eq.s32.totalorder %s20, 0
    %s23 = sadd.s32 %s22, 1
    %s24 = scalar_select %p21, %s22, %s23
    %p27 = pneg %p21
    %p28 = scmp.eq.s32.totalorder %s12, 1
    %p29 = por %p27, %p28
    %p30 = scmp.ne.s32.totalorder %s22, %s25
    %p31 = scmp.eq.s32.totalorder %s12, 0
    %p32 = por %p30, %p31
    %p33 = scmp.ne.s32.totalorder %s22, %s25
    %p34 = scmp.eq.s32.totalorder %s17, 1
    %p35 = por %p33, %p34
    %p36 = scmp.ne.s32.totalorder %s25, %s26
    %p37 = scmp.eq.s32.totalorder %s17, 0
    %p38 = por %p36, %p37
    %p39 = scmp.ne.s32.totalorder %s25, %s26
    %p40 = scmp.eq.s32.totalorder %s18, 1
    %p41 = por %p39, %p40
    %p43 = scmp.ne.s32.totalorder %s26, %s42
    %p44 = scmp.eq.s32.totalorder %s18, 0
    %p45 = por %p43, %p44
    %s47 = sadd.s32 %s46, 1
    %p50 = scmp.eq.s32.totalorder %s12, 1
    %p51 = scmp.ne.s32.totalorder %s46, %s48
    %p52 = scmp.eq.s32.totalorder %s12, 0
    %p53 = por %p51, %p52
    %p54 = scmp.ne.s32.totalorder %s46, %s48
    %p55 = scmp.eq.s32.totalorder %s17, 1
    %p56 = por %p54, %p55
    %p57 = scmp.ne.s32.totalorder %s48, %s49
    %p58 = scmp.eq.s32.totalorder %s17, 0
    %p59 = por %p57, %p58
    %p60 = scmp.ne.s32.totalorder %s48, %s49
    %p61 = scmp.eq.s32.totalorder %s18, 1
    %p62 = por %p60, %p61
    %p64 = scmp.ne.s32.totalorder %s49, %s63
    %p65 = scmp.eq.s32.totalorder %s18, 0
    %p66 = por %p64, %p65
    %s68 = sadd.s32 %s67, 1
    %p71 = scmp.eq.s32.totalorder %s12, 1
    %p72 = scmp.ne.s32.totalorder %s67, %s69
    %p73 = scmp.eq.s32.totalorder %s12, 0
    %p74 = por %p72, %p73
    %p75 = scmp.ne.s32.totalorder %s67, %s69
    %p76 = scmp.eq.s32.totalorder %s17, 1
    %p77 = por %p75, %p76
    %p78 = scmp.ne.s32.totalorder %s69, %s70
    %p79 = scmp.eq.s32.totalorder %s17, 0
    %p80 = por %p78, %p79
    %p81 = scmp.ne.s32.totalorder %s69, %s70
    %p82 = scmp.eq.s32.totalorder %s18, 1
    %p83 = por %p81, %p82
    %p85 = scmp.ne.s32.totalorder %s70, %s84
    %p86 = scmp.eq.s32.totalorder %s18, 0
    %p87 = por %p85, %p86
    %s89 = sadd.s32 %s88, 1
    %p92 = scmp.eq.s32.totalorder %s12, 1
    %p93 = scmp.ne.s32.totalorder %s88, %s90
    %p94 = scmp.eq.s32.totalorder %s12, 0
    %p95 = por %p93, %p94
    %p96 = scmp.ne.s32.totalorder %s88, %s90
    %p97 = scmp.eq.s32.totalorder %s17, 1
    %p98 = por %p96, %p97
    %p99 = scmp.ne.s32.totalorder %s90, %s91
    %p100 = scmp.eq.s32.totalorder %s17, 0
    %p101 = por %p99, %p100
    %p102 = scmp.ne.s32.totalorder %s90, %s91
    %p103 = scmp.eq.s32.totalorder %s18, 1
    %p104 = por %p102, %p103
    %p106 = scmp.ne.s32.totalorder %s91, %s105
    %p107 = scmp.eq.s32.totalorder %s18, 0
    %p108 = por %p106, %p107
    %s109 = ssub.s32 %s12, %s19
    %p110 = scmp.eq.s32.totalorder %s109, 0
    %s112 = sadd.s32 %s111, 1
    %s113 = scalar_select %p110, %s111, %s112
    %p116 = pneg %p110
    %p117 = scmp.eq.s32.totalorder %s12, 1
    %p118 = por %p116, %p117
    %p119 = scmp.ne.s32.totalorder %s111, %s114
    %p120 = scmp.eq.s32.totalorder %s12, 0
    %p121 = por %p119, %p120
    %p122 = scmp.ne.s32.totalorder %s111, %s114
    %p123 = scmp.eq.s32.totalorder %s17, 1
    %p124 = por %p122, %p123
    %p125 = scmp.ne.s32.totalorder %s114, %s115
    %p126 = scmp.eq.s32.totalorder %s17, 0
    %p127 = por %p125, %p126
    %p128 = scmp.ne.s32.totalorder %s114, %s115
    %p129 = scmp.eq.s32.totalorder %s18, 1
    %p130 = por %p128, %p129
    %p132 = scmp.ne.s32.totalorder %s115, %s131
    %p133 = scmp.eq.s32.totalorder %s18, 0
    %p134 = por %p132, %p133
    %s135 = ssub.s32 %s12, %s19
    %p136 = scmp.eq.s32.totalorder %s135, 0
    %s138 = sadd.s32 %s137, 1
    %s139 = scalar_select %p136, %s137, %s138
    %p142 = pneg %p136
    %p143 = scmp.eq.s32.totalorder %s12, 1
    %p144 = por %p142, %p143
    %p145 = scmp.ne.s32.totalorder %s137, %s140
    %p146 = scmp.eq.s32.totalorder %s12, 0
    %p147 = por %p145, %p146
    %p148 = scmp.ne.s32.totalorder %s137, %s140
    %p149 = scmp.eq.s32.totalorder %s17, 1
    %p150 = por %p148, %p149
    %p151 = scmp.ne.s32.totalorder %s140, %s141
    %p152 = scmp.eq.s32.totalorder %s17, 0
    %p153 = por %p151, %p152
    %p154 = scmp.ne.s32.totalorder %s140, %s141
    %p155 = scmp.eq.s32.totalorder %s18, 1
    %p156 = por %p154, %p155
    %p158 = scmp.ne.s32.totalorder %s141, %s157
    %p159 = scmp.eq.s32.totalorder %s18, 0
    %p160 = por %p158, %p159
    %p161 = scmp.le.s32.totalorder 1, %s12
    %p162 = scmp.lt.s32.totalorder %s12, 3
    %p163 = pnand %p161, %p162
    %p164 = pneg %p163
    // Predicated region
    $region9: #{residual_block.4} parent=5 // pred_check
      _
    $region10: #{residual_block.4} parent=5 // pred_check_branch
      %166 = sbr.rel (%p163) target = $region12
    $region11: #{residual_block.4} parent=5 // pred_region
      %s167 = ssub.s32 %s12, 1
      // Predicated region
      $region13: #{residual_block.4} parent=11 // pred_check
        %p168 = pneg %p59
      $region14: #{residual_block.4} parent=11 // pred_check_branch
        %170 = sbr.rel (%p168) target = $region16
      $region15: #{residual_block.4} parent=11 // pred_region
        _
      $region16: #{residual_block.4} parent=11 // pred_fallthru
        _
      // Predicated region
      $region17: #{residual_block.4} parent=11 // pred_check
        %p171 = pneg %p80
      $region18: #{residual_block.4} parent=11 // pred_check_branch
        %173 = sbr.rel (%p171) target = $region20
      $region19: #{residual_block.4} parent=11 // pred_region
        _
      $region20: #{residual_block.4} parent=11 // pred_fallthru
        _
      // Predicated region
      $region21: #{residual_block.4} parent=11 // pred_check
        %p174 = pneg %p101
      $region22: #{residual_block.4} parent=11 // pred_check_branch
        %176 = sbr.rel (%p174) target = $region24
      $region23: #{residual_block.4} parent=11 // pred_region
        _
      $region24: #{residual_block.4} parent=11 // pred_fallthru
        _
    $region12: #{residual_block.4} parent=5 // pred_fallthru
      _
    %p177 = scmp.lt.s32.totalorder %s12, 2
    // Predicated region
    $region25: #{residual_block.4} parent=5 // pred_check
      %p178 = pneg %p177
    $region26: #{residual_block.4} parent=5 // pred_check_branch
      %180 = sbr.rel (%p178) target = $region28
    $region27: #{residual_block.4} parent=5 // pred_region
      // Predicated region
      $region29: #{residual_block.4} parent=27 // pred_check
        %p181 = pneg %p32
      $region30: #{residual_block.4} parent=27 // pred_check_branch
        %183 = sbr.rel (%p181) target = $region32
      $region31: #{residual_block.4} parent=27 // pred_region
        %p184 = scmp.lt.s32.totalorder %s12, 1
        %s185 = scalar_select %p184, %s12, 1
        %s186 = smul.addr %s185, 2
        %s187 = smul.addr %s186, 4
        %s188 = scalar_lea.vmem %s0, %s187
      $region32: #{residual_block.4} parent=27 // pred_fallthru
        _
    $region28: #{residual_block.4} parent=5 // pred_fallthru
      _
    %p189 = scmp.le.s32.totalorder 1, %s12
    %p190 = scmp.lt.s32.totalorder %s12, 3
    %p191 = pnand %p189, %p190
    %p192 = pneg %p191
    // Predicated region
    $region33: #{residual_block.4} parent=5 // pred_check
      _
    $region34: #{residual_block.4} parent=5 // pred_check_branch
      %194 = sbr.rel (%p191) target = $region36
    $region35: #{residual_block.4} parent=5 // pred_region
      %s195 = ssub.s32 %s12, 1
      %p196 = scmp.lt.s32.totalorder %s17, 1
      %s197 = scalar_select %p196, %s17, 1
      %s198 = smul.addr %s197, 2
      %s199 = smul.addr %s198, 4
      %s200 = scalar_lea.vmem %s0, %s199
      %p201 = pneg %p38
      %p202 = pneg %p35
      %p203 = pneg %p59
      %p204 = pneg %p56
      %p205 = pneg %p80
      %p206 = pneg %p77
      %p207 = pneg %p101
      %p208 = pneg %p98
      %p209 = pneg %p127
      %p210 = pneg %p124
      %p211 = scmp.lt.s32.totalorder %s17, 1
      %s212 = scalar_select %p211, %s17, 1
      %s213 = smul.addr %s212, 2
      %s214 = smul.addr %s213, 8
      %s215 = scalar_lea.vmem %s4, %s214
      %p216 = pneg %p153
      %p217 = pneg %p150
      %p218 = scmp.lt.s32.totalorder %s17, 1
      %s219 = scalar_select %p218, %s17, 1
      %s220 = smul.addr %s219, 2
      %s221 = scalar_lea.vmem %s5, %s220
      %p222 = scmp.lt.s32.totalorder %s17, 1
      %s223 = scalar_select %p222, %s17, 1
      %s224 = smul.addr %s223, 2
      %s225 = smul.addr %s224, 4
      %s226 = scalar_lea.vmem %s0, %s225
      %p227 = scmp.lt.s32.totalorder %s17, 1
      %s228 = scalar_select %p227, %s17, 1
      %s229 = smul.addr %s228, 2
      %s230 = smul.addr %s229, 8
      %s231 = scalar_lea.vmem %s4, %s230
      %p232 = scmp.lt.s32.totalorder %s17, 1
      %s233 = scalar_select %p232, %s17, 1
      %s234 = smul.addr %s233, 2
      %s235 = scalar_lea.vmem %s5, %s234
      %v237 = vld [vmem:[%s226] sm:$0xf]
      %v238 = vld [vmem:[%s226 + $0x4] sm:$0xf]
      %v239 = vunpack.c.l.bf16 %v237
      %v240 = vunpack.c.l.bf16 %v238
      %v241 = vld [vmem:[%s1] sm:$0x1]
      %v243 = vlaneseq
      %v244 = vshrl.u32 %v243, 7
      %v245 = vsub.s32 0, %v244
      %v246 = vrot.slane %v241, %v245
      %v248 = vmul.f32 %v239, %v246
      %v249 = vmul.f32 %v240, %v246
      %v250 = vld [vmem:[%s2] sm:$0x1]
      %v252 = vlaneseq
      %v253 = vshrl.u32 %v252, 7
      %v254 = vsub.s32 0, %v253
      %v255 = vrot.slane %v250, %v254
      %v257 = vadd.f32 %v248, %v255
      %v258 = vadd.f32 %v249, %v255
      %v259 = vmax.f32 %v257, 0.0
      %v260 = vmax.f32 %v258, 0.0
      %vm263 = vcmask 1040384
      %v264 = vrot.slane %v259, 7
      %v265 = vrot.slane %v260, 7
      %v266 = vsel %vm263, %v264, %v265
      %v269 = vsel %vm263, 0.0, %v264
      %vm270 = vcmask 1046528
      %v271 = vrot.slane %v259, 1
      %v272 = vrot.slane %v260, 1
      %v273 = vsel %vm270, %v271, %v272
      %v276 = vsel %vm270, %v272, 0.0
      %v277 = vpack.c.bf16 %v266, %v269
      %v278 = vpack.c.bf16 %v260, %v259
      %v279 = vpack.c.bf16 %v276, %v273
      %v280 = vld [vmem:[%s3] sm:$0xf]
      %v281 = vld [vmem:[%s3 + $0x4] sm:$0xf]
      %v282 = vld [vmem:[%s3 + $0x8] sm:$0xf]
      %v283 = vld [vmem:[%s3 + $0xc] sm:$0xf]
      %v284 = vld [vmem:[%s3 + $0x10] sm:$0xf]
      %v285 = vld [vmem:[%s3 + $0x14] sm:$0xf]
      %v286 = vld [vmem:[%s3 + $0x18] sm:$0xf]
      %v287 = vld [vmem:[%s3 + $0x1c] sm:$0xf]
      %v288 = vld [vmem:[%s3 + $0x20] sm:$0xf]
      %v289 = vld [vmem:[%s3 + $0x24] sm:$0xf]
      %v290 = vld [vmem:[%s3 + $0x28] sm:$0xf]
      %v291 = vld [vmem:[%s3 + $0x2c] sm:$0xf]
      %v292 = vld [vmem:[%s3 + $0x30] sm:$0xf]
      %v293 = vld [vmem:[%s3 + $0x34] sm:$0xf]
      %v294 = vld [vmem:[%s3 + $0x38] sm:$0xf]
      %v295 = vld [vmem:[%s3 + $0x3c] sm:$0xf]
      %v296 = vld [vmem:[%s3 + $0x40] sm:$0xf]
      %v297 = vld [vmem:[%s3 + $0x44] sm:$0xf]
      %v298 = vld [vmem:[%s3 + $0x48] sm:$0xf]
      %v299 = vld [vmem:[%s3 + $0x4c] sm:$0xf]
      %v300 = vld [vmem:[%s3 + $0x50] sm:$0xf]
      %v301 = vld [vmem:[%s3 + $0x54] sm:$0xf]
      %v302 = vld [vmem:[%s3 + $0x58] sm:$0xf]
      %v303 = vld [vmem:[%s3 + $0x5c] sm:$0xf]
      %v304 = vld [vmem:[%s3 + $0x60] sm:$0xf]
      %v305 = vld [vmem:[%s3 + $0x64] sm:$0xf]
      %v306 = vld [vmem:[%s3 + $0x68] sm:$0xf]
      %v307 = vld [vmem:[%s3 + $0x6c] sm:$0xf]
      %v308 = vld [vmem:[%s3 + $0x70] sm:$0xf]
      %v309 = vld [vmem:[%s3 + $0x74] sm:$0xf]
      %v310 = vld [vmem:[%s3 + $0x78] sm:$0xf]
      %v311 = vld [vmem:[%s3 + $0x7c] sm:$0xf]
      %v312 = vld [vmem:[%s3 + $0x80] sm:$0xf]
      %v313 = vld [vmem:[%s3 + $0x84] sm:$0xf]
      %v314 = vld [vmem:[%s3 + $0x88] sm:$0xf]
      %v315 = vld [vmem:[%s3 + $0x8c] sm:$0xf]
      %v316 = vld [vmem:[%s3 + $0x90] sm:$0xf]
      %v317 = vld [vmem:[%s3 + $0x94] sm:$0xf]
      %v318 = vld [vmem:[%s3 + $0x98] sm:$0xf]
      %v319 = vld [vmem:[%s3 + $0x9c] sm:$0xf]
      %v320 = vld [vmem:[%s3 + $0xa0] sm:$0xf]
      %v321 = vld [vmem:[%s3 + $0xa4] sm:$0xf]
      %v322 = vld [vmem:[%s3 + $0xa8] sm:$0xf]
      %v323 = vld [vmem:[%s3 + $0xac] sm:$0xf]
      %v324 = vld [vmem:[%s3 + $0xb0] sm:$0xf]
      %v325 = vld [vmem:[%s3 + $0xb4] sm:$0xf]
      %v326 = vld [vmem:[%s3 + $0xb8] sm:$0xf]
      %v327 = vld [vmem:[%s3 + $0xbc] sm:$0xf]
      %v376 = vunpack.c.l.b16 %v280
      %v377 = vunpack.c.l.b16 %v281
      %v378 = vunpack.c.l.b16 %v282
      %v379 = vunpack.c.l.b16 %v283
      %v380 = vunpack.c.l.b16 %v284
      %v381 = vunpack.c.l.b16 %v285
      %v382 = vunpack.c.l.b16 %v286
      %v383 = vunpack.c.l.b16 %v287
      %v384 = vunpack.c.l.b16 %v288
      %v385 = vunpack.c.l.b16 %v289
      %v386 = vunpack.c.l.b16 %v290
      %v387 = vunpack.c.l.b16 %v291
      %v388 = vunpack.c.l.b16 %v292
      %v389 = vunpack.c.l.b16 %v293
      %v390 = vunpack.c.l.b16 %v294
      %v391 = vunpack.c.l.b16 %v295
      %v392 = vunpack.c.l.b16 %v296
      %v393 = vunpack.c.l.b16 %v297
      %v394 = vunpack.c.l.b16 %v298
      %v395 = vunpack.c.l.b16 %v299
      %v396 = vunpack.c.l.b16 %v300
      %v397 = vunpack.c.l.b16 %v301
      %v398 = vunpack.c.l.b16 %v302
      %v399 = vunpack.c.l.b16 %v303
      %v400 = vunpack.c.l.b16 %v304
      %v401 = vunpack.c.l.b16 %v305
      %v402 = vunpack.c.l.b16 %v306
      %v403 = vunpack.c.l.b16 %v307
      %v404 = vunpack.c.l.b16 %v308
      %v405 = vunpack.c.l.b16 %v309
      %v406 = vunpack.c.l.b16 %v310
      %v407 = vunpack.c.l.b16 %v311
      %v408 = vunpack.c.l.b16 %v312
      %v409 = vunpack.c.l.b16 %v313
      %v410 = vunpack.c.l.b16 %v314
      %v411 = vunpack.c.l.b16 %v315
      %v412 = vunpack.c.l.b16 %v316
      %v413 = vunpack.c.l.b16 %v317
      %v414 = vunpack.c.l.b16 %v318
      %v415 = vunpack.c.l.b16 %v319
      %v416 = vunpack.c.l.b16 %v320
      %v417 = vunpack.c.l.b16 %v321
      %v418 = vunpack.c.l.b16 %v322
      %v419 = vunpack.c.l.b16 %v323
      %v420 = vunpack.c.l.b16 %v324
      %v421 = vunpack.c.l.b16 %v325
      %v422 = vunpack.c.l.b16 %v326
      %v423 = vunpack.c.l.b16 %v327
      %v424 = vpack.c.b16 %v377, %v376
      %v425 = vpack.c.b16 %v379, %v378
      %v426 = vpack.c.b16 %v381, %v380
      %v427 = vpack.c.b16 %v383, %v382
      %v428 = vpack.c.b16 %v385, %v384
      %v429 = vpack.c.b16 %v387, %v386
      %v430 = vpack.c.b16 %v389, %v388
      %v431 = vpack.c.b16 %v391, %v390
      %v432 = vpack.c.b16 %v393, %v392
      %v433 = vpack.c.b16 %v395, %v394
      %v434 = vpack.c.b16 %v397, %v396
      %v435 = vpack.c.b16 %v399, %v398
      %v436 = vpack.c.b16 %v401, %v400
      %v437 = vpack.c.b16 %v403, %v402
      %v438 = vpack.c.b16 %v405, %v404
      %v439 = vpack.c.b16 %v407, %v406
      %v440 = vpack.c.b16 %v409, %v408
      %v441 = vpack.c.b16 %v411, %v410
      %v442 = vpack.c.b16 %v413, %v412
      %v443 = vpack.c.b16 %v415, %v414
      %v444 = vpack.c.b16 %v417, %v416
      %v445 = vpack.c.b16 %v419, %v418
      %v446 = vpack.c.b16 %v421, %v420
      %v447 = vpack.c.b16 %v423, %v422
      %472 = vmatprep.subr.bf16.mxu0 0
      %473 = vmatpush1.bf16.msra.mxu0 %v431
      %474 = vmatprep.subr.bf16.mxu0 0
      %475 = vmatpush1.bf16.msra.mxu0 %v430
      %476 = vmatprep.subr.bf16.mxu0 0
      %477 = vmatpush1.bf16.msra.mxu0 %v429
      %478 = vmatprep.subr.bf16.mxu0 0
      %479 = vmatpush1.bf16.msra.mxu0 %v428
      %480 = vmatprep.subr.bf16.mxu0 0
      %481 = vmatpush1.bf16.msra.mxu0 %v427
      %482 = vmatprep.subr.bf16.mxu0 0
      %483 = vmatpush1.bf16.msra.mxu0 %v426
      %484 = vmatprep.subr.bf16.mxu0 0
      %485 = vmatpush1.bf16.msra.mxu0 %v425
      %486 = vmatprep.subr.bf16.mxu0 0
      %487 = vmatpush1.bf16.msra.mxu0 %v424
      %488 = vmatprep.subr.bf16.mxu0 0
      %489 = vmatpush2.bf16.msra.mxu0 %v439
      %490 = vmatprep.subr.bf16.mxu0 0
      %491 = vmatpush2.bf16.msra.mxu0 %v438
      %492 = vmatprep.subr.bf16.mxu0 0
      %493 = vmatpush2.bf16.msra.mxu0 %v437
      %494 = vmatprep.subr.bf16.mxu0 0
      %495 = vmatpush2.bf16.msra.mxu0 %v436
      %496 = vmatprep.subr.bf16.mxu0 0
      %497 = vmatpush2.bf16.msra.mxu0 %v435
      %498 = vmatprep.subr.bf16.mxu0 0
      %499 = vmatpush2.bf16.msra.mxu0 %v434
      %500 = vmatprep.subr.bf16.mxu0 0
      %501 = vmatpush2.bf16.msra.mxu0 %v433
      %502 = vmatprep.subr.bf16.mxu0 0
      %503 = vmatpush2.bf16.msra.mxu0 %v432
      %504 = vmatprep.mubr.bf16.mxu0 %v278
      %505 = vmatmul.mubr.bf16.gmra.mxu0 %v277
      %v506 = vpop.f32.mrf.mxu0
      %v507 = vadd.f32 0.0, %v506
      %v508 = vpop.f32.mrf.mxu0
      %v509 = vpop.f32.mrf.mxu0
      %v510 = vadd.f32 0.0, %v509
      %v511 = vpop.f32.mrf.mxu0
      %512 = vdwg.mxu0
      %513 = vmatprep.subr.bf16.mxu0 0
      %514 = vmatpush1.bf16.msra.mxu0 %v447
      %515 = vmatprep.subr.bf16.mxu0 0
      %516 = vmatpush1.bf16.msra.mxu0 %v446
      %517 = vmatprep.subr.bf16.mxu0 0
      %518 = vmatpush1.bf16.msra.mxu0 %v445
      %519 = vmatprep.subr.bf16.mxu0 0
      %520 = vmatpush1.bf16.msra.mxu0 %v444
      %521 = vmatprep.subr.bf16.mxu0 0
      %522 = vmatpush1.bf16.msra.mxu0 %v443
      %523 = vmatprep.subr.bf16.mxu0 0
      %524 = vmatpush1.bf16.msra.mxu0 %v442
      %525 = vmatprep.subr.bf16.mxu0 0
      %526 = vmatpush1.bf16.msra.mxu0 %v441
      %527 = vmatprep.subr.bf16.mxu0 0
      %528 = vmatpush1.bf16.msra.mxu0 %v440
      %529 = vmatprep.subr.bf16.mxu0 0
      %530 = vmatpush2.bf16.msra.mxu0 0
      %531 = vmatprep.subr.bf16.mxu0 0
      %532 = vmatpush2.bf16.msra.mxu0 0
      %533 = vmatprep.subr.bf16.mxu0 0
      %534 = vmatpush2.bf16.msra.mxu0 0
      %535 = vmatprep.subr.bf16.mxu0 0
      %536 = vmatpush2.bf16.msra.mxu0 0
      %537 = vmatprep.subr.bf16.mxu0 0
      %538 = vmatpush2.bf16.msra.mxu0 0
      %539 = vmatprep.subr.bf16.mxu0 0
      %540 = vmatpush2.bf16.msra.mxu0 0
      %541 = vmatprep.subr.bf16.mxu0 0
      %542 = vmatpush2.bf16.msra.mxu0 0
      %543 = vmatprep.subr.bf16.mxu0 0
      %544 = vmatpush2.bf16.msra.mxu0 0
      %545 = vmatprep.mubr.bf16.mxu0 0
      %546 = vmatmul.mubr.bf16.gmra.mxu0 %v279
      %v547 = vpop.f32.mrf.mxu0
      %v548 = vadd.f32 %v507, %v547
      %v549 = vpop.f32.mrf.mxu0
      %v550 = vpop.f32.mrf.mxu0
      %v551 = vadd.f32 %v510, %v550
      %v552 = vpop.f32.mrf.mxu0
      %553 = vdwg.mxu0
      %v554 = vadd.f32 %v548, %v551
      %v555 = vrot.slane %v554, 4
      %v556 = vadd.f32 %v554, %v555
      %v557 = vrot.slane %v556, 2
      %v558 = vadd.f32 %v556, %v557
      %v559 = vrot.slane %v558, 1
      %v560 = vadd.f32 %v558, %v559
      %v561 = vmul.f32 %v548, %v548
      %v562 = vmul.f32 %v551, %v551
      %v563 = vadd.f32 %v561, %v562
      %v564 = vrot.slane %v563, 4
      %v565 = vadd.f32 %v563, %v564
      %v566 = vrot.slane %v565, 2
      %v567 = vadd.f32 %v565, %v566
      %v568 = vrot.slane %v567, 1
      %v569 = vadd.f32 %v567, %v568
      %v570 = vsel %vm263, %v560, %v569
      %571 = vst [vmem:[%s235] sm:$0x3] %v570
      %572 = vst [vmem:[%s231] sm:$0xff] %v548
      %573 = vst [vmem:[%s231 + $0x8] sm:$0xff] %v551
      %p574 = scmp.lt.s32.totalorder %s17, 1
      %s575 = scalar_select %p574, %s17, 1
      %s576 = smul.addr %s575, 2
      %s577 = smul.addr %s576, 8
      %s578 = scalar_lea.vmem %s4, %s577
      %p579 = scmp.lt.s32.totalorder %s17, 1
      %s580 = scalar_select %p579, %s17, 1
      %s581 = smul.addr %s580, 2
      %s582 = scalar_lea.vmem %s5, %s581
      // Predicated region
      $region37: #{residual_block.4} parent=35 // pred_check
        %p583 = pneg %p124
      $region38: #{residual_block.4} parent=35 // pred_check_branch
        %585 = sbr.rel (%p583) target = $region40
      $region39: #{residual_block.4} parent=35 // pred_region
        _
      $region40: #{residual_block.4} parent=35 // pred_fallthru
        _
      // Predicated region
      $region41: #{residual_block.4} parent=35 // pred_check
        %p586 = pneg %p150
      $region42: #{residual_block.4} parent=35 // pred_check_branch
        %588 = sbr.rel (%p586) target = $region44
      $region43: #{residual_block.4} parent=35 // pred_region
        _
      $region44: #{residual_block.4} parent=35 // pred_fallthru
        _
    $region36: #{residual_block.4} parent=5 // pred_fallthru
      _
    %p589 = scmp.le.s32.totalorder 2, %s12
    // Predicated region
    $region45: #{residual_block.4} parent=5 // pred_check
      %p590 = pneg %p589
    $region46: #{residual_block.4} parent=5 // pred_check_branch
      %592 = sbr.rel (%p590) target = $region48
    $region47: #{residual_block.4} parent=5 // pred_region
      %s593 = ssub.s32 %s12, 2
      // Predicated region
      $region49: #{residual_block.4} parent=47 // pred_check
        %p594 = pneg %p130
      $region50: #{residual_block.4} parent=47 // pred_check_branch
        %596 = sbr.rel (%p594) target = $region52
      $region51: #{residual_block.4} parent=47 // pred_region
        %p597 = scmp.lt.s32.totalorder %s18, 1
        %s598 = scalar_select %p597, %s18, 1
        %s599 = smul.addr %s598, 2
        %s600 = smul.addr %s599, 8
        %s601 = scalar_lea.vmem %s4, %s600
      $region52: #{residual_block.4} parent=47 // pred_fallthru
        _
      // Predicated region
      $region53: #{residual_block.4} parent=47 // pred_check
        %p602 = pneg %p156
      $region54: #{residual_block.4} parent=47 // pred_check_branch
        %604 = sbr.rel (%p602) target = $region56
      $region55: #{residual_block.4} parent=47 // pred_region
        %p605 = scmp.lt.s32.totalorder %s18, 1
        %s606 = scalar_select %p605, %s18, 1
        %s607 = smul.addr %s606, 2
        %s608 = scalar_lea.vmem %s5, %s607
      $region56: #{residual_block.4} parent=47 // pred_fallthru
        _
    $region48: #{residual_block.4} parent=5 // pred_fallthru
      _
  $region6: #{residual_block.4} parent=0 // loop_footer
    %s16 = sadd.s32 1, %s12
  $region7: #{residual_block.4} parent=0 // loop_footer_branch
    %11 = sbr.rel target = $region3
  $region8: #{residual_block.4} parent=0 // loop_exit
    _

// kernel: residual_block.5
$region0: #{residual_block.5}
  #allocation0 [shape = 'u32[]', space=smem, size = 0x4, offset = 0x4, fixed_abs, tag = 'smem constant byte address 0x4 - core index']
  #allocation1 [shape = 'u32[144,128]{1,0:T(1,128)}', space=vmem, size = 0x12000, scoped, tag = 'internal scratch']
  %s0 = inlined_call_operand.vmem [shape: f32[2,16,64], index: 0, kind: input, shape index: {}]
  %s1 = inlined_call_operand.vmem [shape: f32[2,16,128], index: 1, kind: input, shape index: {}]
  %s2 = inlined_call_operand.vmem [shape: bf16[64,128], index: 2, kind: input, shape index: {}]
  %s3 = inlined_call_operand.vmem [shape: f32[1,128], index: 3, kind: input, shape index: {}]
  %s4 = inlined_call_operand.vmem [shape: f32[1,128], index: 4, kind: input, shape index: {}]
  %s5 = inlined_call_operand.vmem [shape: f32[1,128], index: 5, kind: input, shape index: {}]
  %s6 = inlined_call_operand.vmem [shape: f32[2,16,128], index: 6, kind: output, shape index: {}]
  %s7 = sld [smem:[#allocation0]]
  $region57: #{residual_block.5} parent=0
    _
  %s9 = ssub.s32 1, %s7
  %s10 = scalar_select 0, %s9, %s7
  loop: start=0, step=1, limit=4
  $region2: #{residual_block.5} parent=0 // loop_pre_header
    _
  $region3: #{residual_block.5} parent=0 // loop_header
    %s12 = sphi 0, %s16
    %p13 = scmp.ge.s32.totalorder %s12, 4
    %s22 = sphi 0, %s24
    %s25 = sphi 0, %s22
    %s26 = sphi 0, %s25
    %s42 = sphi 0, %s26
    %s48 = sphi 0, %s50
    %s51 = sphi 0, %s48
    %s52 = sphi 0, %s51
    %s68 = sphi 0, %s52
    %s72 = sphi 0, %s72
    %s74 = sphi 0, %s72
    %s75 = sphi 0, %s74
    %s89 = sphi 0, %s75
    %s93 = sphi 0, %s93
    %s95 = sphi 0, %s93
    %s96 = sphi 0, %s95
    %s110 = sphi 0, %s96
    %s114 = sphi 0, %s114
    %s116 = sphi 0, %s114
    %s117 = sphi 0, %s116
    %s131 = sphi 0, %s117
    %s135 = sphi 0, %s135
    %s137 = sphi 0, %s135
    %s138 = sphi 0, %s137
    %s152 = sphi 0, %s138
    %s158 = sphi 0, %s160
    %s161 = sphi 0, %s158
    %s162 = sphi 0, %s161
    %s178 = sphi 0, %s162
  $region4: #{residual_block.5} parent=0 // loop_header_branch
    %15 = sbr.rel (%p13) target = $region8
  $region5: #{residual_block.5} parent=0 // loop_body
    %s17 = ssub.s32 %s12, 1
    %s18 = ssub.s32 %s12, 2
    %s19 = sadd.s32 %s12, 1
    %s20 = ssub.s32 %s12, %s19
    %p21 = scmp.eq.s32.totalorder %s20, 0
    %s23 = sadd.s32 %s22, 1
    %s24 = scalar_select %p21, %s22, %s23
    %p27 = pneg %p21
    %p28 = scmp.eq.s32.totalorder %s12, 1
    %p29 = por %p27, %p28
    %p30 = scmp.ne.s32.totalorder %s22, %s25
    %p31 = scmp.eq.s32.totalorder %s12, 0
    %p32 = por %p30, %p31
    %p33 = scmp.ne.s32.totalorder %s22, %s25
    %p34 = scmp.eq.s32.totalorder %s17, 1
    %p35 = por %p33, %p34
    %p36 = scmp.ne.s32.totalorder %s25, %s26
    %p37 = scmp.eq.s32.totalorder %s17, 0
    %p38 = por %p36, %p37
    %p39 = scmp.ne.s32.totalorder %s25, %s26
    %p40 = scmp.eq.s32.totalorder %s18, 1
    %p41 = por %p39, %p40
    %p43 = scmp.ne.s32.totalorder %s26, %s42
    %p44 = scmp.eq.s32.totalorder %s18, 0
    %p45 = por %p43, %p44
    %s46 = ssub.s32 %s12, %s19
    %p47 = scmp.eq.s32.totalorder %s46, 0
    %s49 = sadd.s32 %s48, 1
    %s50 = scalar_select %p47, %s48, %s49
    %p53 = pneg %p47
    %p54 = scmp.eq.s32.totalorder %s12, 1
    %p55 = por %p53, %p54
    %p56 = scmp.ne.s32.totalorder %s48, %s51
    %p57 = scmp.eq.s32.totalorder %s12, 0
    %p58 = por %p56, %p57
    %p59 = scmp.ne.s32.totalorder %s48, %s51
    %p60 = scmp.eq.s32.totalorder %s17, 1
    %p61 = por %p59, %p60
    %p62 = scmp.ne.s32.totalorder %s51, %s52
    %p63 = scmp.eq.s32.totalorder %s17, 0
    %p64 = por %p62, %p63
    %p65 = scmp.ne.s32.totalorder %s51, %s52
    %p66 = scmp.eq.s32.totalorder %s18, 1
    %p67 = por %p65, %p66
    %p69 = scmp.ne.s32.totalorder %s52, %s68
    %p70 = scmp.eq.s32.totalorder %s18, 0
    %p71 = por %p69, %p70
    %s73 = sadd.s32 %s72, 1
    %p76 = scmp.eq.s32.totalorder %s12, 1
    %p77 = scmp.ne.s32.totalorder %s72, %s74
    %p78 = scmp.eq.s32.totalorder %s12, 0
    %p79 = por %p77, %p78
    %p80 = scmp.ne.s32.totalorder %s72, %s74
    %p81 = scmp.eq.s32.totalorder %s17, 1
    %p82 = por %p80, %p81
    %p83 = scmp.ne.s32.totalorder %s74, %s75
    %p84 = scmp.eq.s32.totalorder %s17, 0
    %p85 = por %p83, %p84
    %p86 = scmp.ne.s32.totalorder %s74, %s75
    %p87 = scmp.eq.s32.totalorder %s18, 1
    %p88 = por %p86, %p87
    %p90 = scmp.ne.s32.totalorder %s75, %s89
    %p91 = scmp.eq.s32.totalorder %s18, 0
    %p92 = por %p90, %p91
    %s94 = sadd.s32 %s93, 1
    %p97 = scmp.eq.s32.totalorder %s12, 1
    %p98 = scmp.ne.s32.totalorder %s93, %s95
    %p99 = scmp.eq.s32.totalorder %s12, 0
    %p100 = por %p98, %p99
    %p101 = scmp.ne.s32.totalorder %s93, %s95
    %p102 = scmp.eq.s32.totalorder %s17, 1
    %p103 = por %p101, %p102
    %p104 = scmp.ne.s32.totalorder %s95, %s96
    %p105 = scmp.eq.s32.totalorder %s17, 0
    %p106 = por %p104, %p105
    %p107 = scmp.ne.s32.totalorder %s95, %s96
    %p108 = scmp.eq.s32.totalorder %s18, 1
    %p109 = por %p107, %p108
    %p111 = scmp.ne.s32.totalorder %s96, %s110
    %p112 = scmp.eq.s32.totalorder %s18, 0
    %p113 = por %p111, %p112
    %s115 = sadd.s32 %s114, 1
    %p118 = scmp.eq.s32.totalorder %s12, 1
    %p119 = scmp.ne.s32.totalorder %s114, %s116
    %p120 = scmp.eq.s32.totalorder %s12, 0
    %p121 = por %p119, %p120
    %p122 = scmp.ne.s32.totalorder %s114, %s116
    %p123 = scmp.eq.s32.totalorder %s17, 1
    %p124 = por %p122, %p123
    %p125 = scmp.ne.s32.totalorder %s116, %s117
    %p126 = scmp.eq.s32.totalorder %s17, 0
    %p127 = por %p125, %p126
    %p128 = scmp.ne.s32.totalorder %s116, %s117
    %p129 = scmp.eq.s32.totalorder %s18, 1
    %p130 = por %p128, %p129
    %p132 = scmp.ne.s32.totalorder %s117, %s131
    %p133 = scmp.eq.s32.totalorder %s18, 0
    %p134 = por %p132, %p133
    %s136 = sadd.s32 %s135, 1
    %p139 = scmp.eq.s32.totalorder %s12, 1
    %p140 = scmp.ne.s32.totalorder %s135, %s137
    %p141 = scmp.eq.s32.totalorder %s12, 0
    %p142 = por %p140, %p141
    %p143 = scmp.ne.s32.totalorder %s135, %s137
    %p144 = scmp.eq.s32.totalorder %s17, 1
    %p145 = por %p143, %p144
    %p146 = scmp.ne.s32.totalorder %s137, %s138
    %p147 = scmp.eq.s32.totalorder %s17, 0
    %p148 = por %p146, %p147
    %p149 = scmp.ne.s32.totalorder %s137, %s138
    %p150 = scmp.eq.s32.totalorder %s18, 1
    %p151 = por %p149, %p150
    %p153 = scmp.ne.s32.totalorder %s138, %s152
    %p154 = scmp.eq.s32.totalorder %s18, 0
    %p155 = por %p153, %p154
    %s156 = ssub.s32 %s12, %s19
    %p157 = scmp.eq.s32.totalorder %s156, 0
    %s159 = sadd.s32 %s158, 1
    %s160 = scalar_select %p157, %s158, %s159
    %p163 = pneg %p157
    %p164 = scmp.eq.s32.totalorder %s12, 1
    %p165 = por %p163, %p164
    %p166 = scmp.ne.s32.totalorder %s158, %s161
    %p167 = scmp.eq.s32.totalorder %s12, 0
    %p168 = por %p166, %p167
    %p169 = scmp.ne.s32.totalorder %s158, %s161
    %p170 = scmp.eq.s32.totalorder %s17, 1
    %p171 = por %p169, %p170
    %p172 = scmp.ne.s32.totalorder %s161, %s162
    %p173 = scmp.eq.s32.totalorder %s17, 0
    %p174 = por %p172, %p173
    %p175 = scmp.ne.s32.totalorder %s161, %s162
    %p176 = scmp.eq.s32.totalorder %s18, 1
    %p177 = por %p175, %p176
    %p179 = scmp.ne.s32.totalorder %s162, %s178
    %p180 = scmp.eq.s32.totalorder %s18, 0
    %p181 = por %p179, %p180
    %p182 = scmp.le.s32.totalorder 1, %s12
    %p183 = scmp.lt.s32.totalorder %s12, 3
    %p184 = pnand %p182, %p183
    %p185 = pneg %p184
    // Predicated region
    $region9: #{residual_block.5} parent=5 // pred_check
      _
    $region10: #{residual_block.5} parent=5 // pred_check_branch
      %187 = sbr.rel (%p184) target = $region12
    $region11: #{residual_block.5} parent=5 // pred_region
      %s188 = ssub.s32 %s12, 1
      // Predicated region
      $region13: #{residual_block.5} parent=11 // pred_check
        %p189 = pneg %p85
      $region14: #{residual_block.5} parent=11 // pred_check_branch
        %191 = sbr.rel (%p189) target = $region16
      $region15: #{residual_block.5} parent=11 // pred_region
        _
      $region16: #{residual_block.5} parent=11 // pred_fallthru
        _
      // Predicated region
      $region17: #{residual_block.5} parent=11 // pred_check
        %p192 = pneg %p106
      $region18: #{residual_block.5} parent=11 // pred_check_branch
        %194 = sbr.rel (%p192) target = $region20
      $region19: #{residual_block.5} parent=11 // pred_region
        _
      $region20: #{residual_block.5} parent=11 // pred_fallthru
        _
      // Predicated region
      $region21: #{residual_block.5} parent=11 // pred_check
        %p195 = pneg %p127
      $region22: #{residual_block.5} parent=11 // pred_check_branch
        %197 = sbr.rel (%p195) target = $region24
      $region23: #{residual_block.5} parent=11 // pred_region
        _
      $region24: #{residual_block.5} parent=11 // pred_fallthru
        _
      // Predicated region
      $region25: #{residual_block.5} parent=11 // pred_check
        %p198 = pneg %p148
      $region26: #{residual_block.5} parent=11 // pred_check_branch
        %200 = sbr.rel (%p198) target = $region28
      $region27: #{residual_block.5} parent=11 // pred_region
        _
      $region28: #{residual_block.5} parent=11 // pred_fallthru
        _
    $region12: #{residual_block.5} parent=5 // pred_fallthru
      _
    %p201 = scmp.lt.s32.totalorder %s12, 2
    // Predicated region
    $region29: #{residual_block.5} parent=5 // pred_check
      %p202 = pneg %p201
    $region30: #{residual_block.5} parent=5 // pred_check_branch
      %204 = sbr.rel (%p202) target = $region32
    $region31: #{residual_block.5} parent=5 // pred_region
      // Predicated region
      $region33: #{residual_block.5} parent=31 // pred_check
        %p205 = pneg %p32
      $region34: #{residual_block.5} parent=31 // pred_check_branch
        %207 = sbr.rel (%p205) target = $region36
      $region35: #{residual_block.5} parent=31 // pred_region
        %p208 = scmp.lt.s32.totalorder %s12, 1
        %s209 = scalar_select %p208, %s12, 1
        %s210 = smul.addr %s209, 2
        %s211 = smul.addr %s210, 8
        %s212 = scalar_lea.vmem %s0, %s211
      $region36: #{residual_block.5} parent=31 // pred_fallthru
        _
      // Predicated region
      $region37: #{residual_block.5} parent=31 // pred_check
        %p213 = pneg %p58
      $region38: #{residual_block.5} parent=31 // pred_check_branch
        %215 = sbr.rel (%p213) target = $region40
      $region39: #{residual_block.5} parent=31 // pred_region
        %p216 = scmp.lt.s32.totalorder %s12, 1
        %s217 = scalar_select %p216, %s12, 1
        %s218 = smul.addr %s217, 2
        %s219 = smul.addr %s218, 8
        %s220 = scalar_lea.vmem %s1, %s219
      $region40: #{residual_block.5} parent=31 // pred_fallthru
        _
    $region32: #{residual_block.5} parent=5 // pred_fallthru
      _
    %p221 = scmp.le.s32.totalorder 1, %s12
    %p222 = scmp.lt.s32.totalorder %s12, 3
    %p223 = pnand %p221, %p222
    %p224 = pneg %p223
    // Predicated region
    $region41: #{residual_block.5} parent=5 // pred_check
      _
    $region42: #{residual_block.5} parent=5 // pred_check_branch
      %226 = sbr.rel (%p223) target = $region44
    $region43: #{residual_block.5} parent=5 // pred_region
      %s227 = ssub.s32 %s12, 1
      %p228 = scmp.lt.s32.totalorder %s17, 1
      %s229 = scalar_select %p228, %s17, 1
      %s230 = smul.addr %s229, 2
      %s231 = smul.addr %s230, 8
      %s232 = scalar_lea.vmem %s0, %s231
      %p233 = pneg %p38
      %p234 = pneg %p35
      %p235 = scmp.lt.s32.totalorder %s17, 1
      %s236 = scalar_select %p235, %s17, 1
      %s237 = smul.addr %s236, 2
      %s238 = smul.addr %s237, 8
      %s239 = scalar_lea.vmem %s1, %s238
      %p240 = pneg %p64
      %p241 = pneg %p61
      %p242 = pneg %p85
      %p243 = pneg %p82
      %p244 = pneg %p106
      %p245 = pneg %p103
      %p246 = pneg %p127
      %p247 = pneg %p124
      %p248 = pneg %p148
      %p249 = pneg %p145
      %p250 = pneg %p174
      %p251 = pneg %p171
      %p252 = scmp.lt.s32.totalorder %s17, 1
      %s253 = scalar_select %p252, %s17, 1
      %s254 = smul.addr %s253, 2
      %s255 = smul.addr %s254, 8
      %s256 = scalar_lea.vmem %s6, %s255
      %p257 = scmp.lt.s32.totalorder %s17, 1
      %s258 = scalar_select %p257, %s17, 1
      %s259 = smul.addr %s258, 2
      %s260 = smul.addr %s259, 8
      %s261 = scalar_lea.vmem %s0, %s260
      %p262 = scmp.lt.s32.totalorder %s17, 1
      %s263 = scalar_select %p262, %s17, 1
      %s264 = smul.addr %s263, 2
      %s265 = smul.addr %s264, 8
      %s266 = scalar_lea.vmem %s1, %s265
      %p267 = scmp.lt.s32.totalorder %s17, 1
      %s268 = scalar_select %p267, %s17, 1
      %s269 = smul.addr %s268, 2
      %s270 = smul.addr %s269, 8
      %s271 = scalar_lea.vmem %s6, %s270
      %v273 = vld [vmem:[%s261] sm:$0xff]
      %v274 = vld [vmem:[%s261 + $0x8] sm:$0xff]
      %v275 = vpack.c.bf16 %v274, %v273
      %v276 = vld [vmem:[%s2] sm:$0xf]
      %v277 = vld [vmem:[%s2 + $0x4] sm:$0xf]
      %v278 = vld [vmem:[%s2 + $0x8] sm:$0xf]
      %v279 = vld [vmem:[%s2 + $0xc] sm:$0xf]
      %v280 = vld [vmem:[%s2 + $0x10] sm:$0xf]
      %v281 = vld [vmem:[%s2 + $0x14] sm:$0xf]
      %v282 = vld [vmem:[%s2 + $0x18] sm:$0xf]
      %v283 = vld [vmem:[%s2 + $0x1c] sm:$0xf]
      %v284 = vld [vmem:[%s3] sm:$0x1]
      %v286 = vlaneseq
      %v287 = vshrl.u32 %v286, 7
      %v288 = vsub.s32 0, %v287
      %v289 = vrot.slane %v284, %v288
      %v299 = vunpack.c.l.b16 %v276
      %v300 = vunpack.c.l.b16 %v277
      %v301 = vunpack.c.l.b16 %v278
      %v302 = vunpack.c.l.b16 %v279
      %v303 = vunpack.c.l.b16 %v280
      %v304 = vunpack.c.l.b16 %v281
      %v305 = vunpack.c.l.b16 %v282
      %v306 = vunpack.c.l.b16 %v283
      %v307 = vpack.c.b16 %v300, %v299
      %v308 = vpack.c.b16 %v302, %v301
      %v309 = vpack.c.b16 %v304, %v303
      %v310 = vpack.c.b16 %v306, %v305
      %vm315 = vcmask 523264
      %v317 = vsel %vm315, %v275, 0
      %319 = vmatprep.subr.bf16.mxu0 0
      %320 = vmatpush1.bf16.msra.mxu0 0
      %321 = vmatprep.subr.bf16.mxu0 0
      %322 = vmatpush1.bf16.msra.mxu0 0
      %323 = vmatprep.subr.bf16.mxu0 0
      %324 = vmatpush1.bf16.msra.mxu0 0
      %325 = vmatprep.subr.bf16.mxu0 0
      %326 = vmatpush1.bf16.msra.mxu0 0
      %327 = vmatprep.subr.bf16.mxu0 0
      %328 = vmatpush1.bf16.msra.mxu0 %v310
      %329 = vmatprep.subr.bf16.mxu0 0
      %330 = vmatpush1.bf16.msra.mxu0 %v309
      %331 = vmatprep.subr.bf16.mxu0 0
      %332 = vmatpush1.bf16.msra.mxu0 %v308
      %333 = vmatprep.subr.bf16.mxu0 0
      %334 = vmatpush1.bf16.msra.mxu0 %v307
      %335 = vmatprep.subr.bf16.mxu0 0
      %336 = vmatpush2.bf16.msra.mxu0 0
      %337 = vmatprep.subr.bf16.mxu0 0
      %338 = vmatpush2.bf16.msra.mxu0 0
      %339 = vmatprep.subr.bf16.mxu0 0
      %340 = vmatpush2.bf16.msra.mxu0 0
      %341 = vmatprep.subr.bf16.mxu0 0
      %342 = vmatpush2.bf16.msra.mxu0 0
      %343 = vmatprep.subr.bf16.mxu0 0
      %344 = vmatpush2.bf16.msra.mxu0 0
      %345 = vmatprep.subr.bf16.mxu0 0
      %346 = vmatpush2.bf16.msra.mxu0 0
      %347 = vmatprep.subr.bf16.mxu0 0
      %348 = vmatpush2.bf16.msra.mxu0 0
      %349 = vmatprep.subr.bf16.mxu0 0
      %350 = vmatpush2.bf16.msra.mxu0 0
      %351 = vmatprep.mubr.bf16.mxu0 0
      %352 = vmatmul.mubr.bf16.gmra.mxu0 %v317
      %v353 = vpop.f32.mrf.mxu0
      %v354 = vadd.f32 %v289, %v353
      %v355 = vpop.f32.mrf.mxu0
      %v356 = vpop.f32.mrf.mxu0
      %v357 = vadd.f32 %v289, %v356
      %v358 = vpop.f32.mrf.mxu0
      %359 = vdwg.mxu0
      %v360 = vld [vmem:[%s266] sm:$0xff]
      %v361 = vld [vmem:[%s266 + $0x8] sm:$0xff]
      %v362 = vld [vmem:[%s4] sm:$0x1]
      %v364 = vlaneseq
      %v365 = vshrl.u32 %v364, 7
      %v366 = vsub.s32 0, %v365
      %v367 = vrot.slane %v362, %v366
      %v369 = vmul.f32 %v360, %v367
      %v370 = vmul.f32 %v361, %v367
      %v371 = vld [vmem:[%s5] sm:$0x1]
      %v373 = vlaneseq
      %v374 = vshrl.u32 %v373, 7
      %v375 = vsub.s32 0, %v374
      %v376 = vrot.slane %v371, %v375
      %v378 = vadd.f32 %v369, %v376
      %v379 = vadd.f32 %v370, %v376
      %v380 = vadd.f32 %v378, %v354
      %v381 = vadd.f32 %v379, %v357
      %v382 = vmax.f32 %v380, 0.0
      %v383 = vmax.f32 %v381, 0.0
      %384 = vst [vmem:[%s271] sm:$0xff] %v382
      %385 = vst [vmem:[%s271 + $0x8] sm:$0xff] %v383
      %p386 = scmp.lt.s32.totalorder %s17, 1
      %s387 = scalar_select %p386, %s17, 1
      %s388 = smul.addr %s387, 2
      %s389 = smul.addr %s388, 8
      %s390 = scalar_lea.vmem %s6, %s389
      // Predicated region
      $region45: #{residual_block.5} parent=43 // pred_check
        %p391 = pneg %p171
      $region46: #{residual_block.5} parent=43 // pred_check_branch
        %393 = sbr.rel (%p391) target = $region48
      $region47: #{residual_block.5} parent=43 // pred_region
        _
      $region48: #{residual_block.5} parent=43 // pred_fallthru
        _
    $region44: #{residual_block.5} parent=5 // pred_fallthru
      _
    %p394 = scmp.le.s32.totalorder 2, %s12
    // Predicated region
    $region49: #{residual_block.5} parent=5 // pred_check
      %p395 = pneg %p394
    $region50: #{residual_block.5} parent=5 // pred_check_branch
      %397 = sbr.rel (%p395) target = $region52
    $region51: #{residual_block.5} parent=5 // pred_region
      %s398 = ssub.s32 %s12, 2
      // Predicated region
      $region53: #{residual_block.5} parent=51 // pred_check
        %p399 = pneg %p177
      $region54: #{residual_block.5} parent=51 // pred_check_branch
        %401 = sbr.rel (%p399) target = $region56
      $region55: #{residual_block.5} parent=51 // pred_region
        %p402 = scmp.lt.s32.totalorder %s18, 1
        %s403 = scalar_select %p402, %s18, 1
        %s404 = smul.addr %s403, 2
        %s405 = smul.addr %s404, 8
        %s406 = scalar_lea.vmem %s6, %s405
      $region56: #{residual_block.5} parent=51 // pred_fallthru
        _
    $region52: #{residual_block.5} parent=5 // pred_fallthru
      _
  $region6: #{residual_block.5} parent=0 // loop_footer
    %s16 = sadd.s32 1, %s12
  $region7: #{residual_block.5} parent=0 // loop_footer_branch
    %11 = sbr.rel target = $region3
  $region8: #{residual_block.5} parent=0 // loop_exit
    _

</llo_original>
